<compile_context>
chip_gen: v5e
topology: v5e:2x2
jax: 0.10.0
libtpu: 0.0.40
codegen_flags: <defaults>
</compile_context>

<pallas_src>
import functools
import math

import jax
import jax.numpy as jnp
from jax import lax
from jax.experimental import pallas as pl
from jax.experimental.pallas import tpu as pltpu


def _contracting_kernel(x_ref, w1_ref, b1_ref, w2_ref, b2_ref, sel_ref, mask_ref,
                        p_ref, y_ref, patch1_scr, patch2_scr, *, H, W, Bt, chunk):
    """One batch tile (Bt images, folded onto the lane axis) per grid step.

    x_ref      : (Cin_p, Bt*HW)            input tile (channels padded to 8)
    w1_ref     : (Cout_p, 9*Cin_p)  bf16   conv1 weight as matmul (BN folded)
    b1_ref     : (Cout_p, 1)        f32    conv1 bias (BN folded)
    w2_ref     : (Cout_p, 9*Cout_p) bf16   conv2 weight as matmul (BN folded)
    b2_ref     : (Cout_p, 1)        f32    conv2 bias (BN folded)
    sel_ref    : (chunk*HW, chunk*HWq) bf16  0/1 pooling-anchor compaction matrix
    mask_ref   : (9, Bt*HW)         f32    per-tap in-image validity masks
    p_ref      : (Cout_p, Bt*HWq)          pooled output (lane-dense slab)
    y_ref      : (Bt, Cout_p, HW)          pre-pool output (per-image, HW lane-dense)
    patch1_scr : (9*Cin_p,  Bt*HW)  bf16   conv1 im2col scratch
    patch2_scr : (9*Cout_p, Bt*HW)  bf16   conv2 im2col scratch
    """
    HW = H * W
    HWq = (H // 2) * (W // 2)
    N = Bt * HW

    x = x_ref[...]                                           # (Cin_p, N) f32
    taps = [(oy, ox) for oy in (-1, 0, 1) for ox in (-1, 0, 1)]
    # Load the 9 per-tap masks once; reused by both im2col fills.
    mrows = [mask_ref[t:t + 1, :] for t in range(9)]         # each (1, N) f32

    def fill(scr, v):
        """Batched im2col for a 3x3 / pad=1 conv over the whole tile:
        scr[tap*C:(tap+1)*C, p] = v[:, p + off_tap], zeroed where the tap source lies
        outside its image.  One lane roll + select + aligned full-width store per tap.
        """
        C = v.shape[0]
        for tap, (oy, ox) in enumerate(taps):
            off = oy * W + ox
            if off == 0:
                s = v
            else:
                # roll(v, shift)[p] == v[(p - shift) mod N]  ->  shift = -off mod N
                s = pltpu.roll(v, (-off) % N, axis=1)
                s = jnp.where(mrows[tap] > 0.5, s, 0.0)      # zero out-of-image taps
            scr[tap * C:(tap + 1) * C, :] = s.astype(scr.dtype)

    # conv1 (+ folded BN) + ReLU: one bf16 MXU matmul over the whole tile.
    fill(patch1_scr, x)
    h = jnp.dot(w1_ref[...], patch1_scr[...], preferred_element_type=jnp.float32)
    h = jnp.maximum(h + b1_ref[...], 0.0)                    # (Cout_p, N) f32

    # conv2 (+ folded BN) + ReLU.
    fill(patch2_scr, h)
    y = jnp.dot(w2_ref[...], patch2_scr[...], preferred_element_type=jnp.float32)
    y = jnp.maximum(y + b2_ref[...], 0.0)                    # (Cout_p, N) f32

    # Pre-pool activations: per-image lane-dense (HW-wide, aligned) stores.
    for t in range(Bt):
        y_ref[t] = y[:, t * HW:(t + 1) * HW].astype(y_ref.dtype)

    # 2x2 / stride-2 max-pool.
    # Two lane rolls compute the max over {p, p+1, p+W, p+W+1} at every position;
    # positions wrapping across image boundaries are never selected as anchors.
    m1 = jnp.maximum(y, pltpu.roll(y, N - 1, axis=1))        # horizontal pair max
    mm = jnp.maximum(m1, pltpu.roll(m1, N - W, axis=1))      # full 2x2 window max
    sel = sel_ref[...]
    for u in range(Bt // chunk):
        mc = mm[:, u * chunk * HW:(u + 1) * chunk * HW].astype(sel.dtype)
        pc = jnp.dot(mc, sel, preferred_element_type=jnp.float32)
        # chunk*HWq is a multiple of 128 -> unmasked lane-dense store.
        p_ref[:, u * chunk * HWq:(u + 1) * chunk * HWq] = pc.astype(p_ref.dtype)


def _pick_tile(B, HW, HWq):
    """Pick (batch_tile, chunk): chunk = images per lane-dense pooled slab,
    batch_tile = smallest multiple of chunk dividing B with a reasonably wide N."""
    chunk = math.lcm(HWq, 128) // HWq
    if B % chunk != 0:
        return B, B
    cands = [bt for bt in range(chunk, B + 1, chunk) if B % bt == 0]
    for bt in cands:
        if bt * HW >= 2048:           # feed the MXU a wide N per grid step
            return bt, chunk
    return cands[-1], chunk


def contracting_layer_forward(x_nchw, params, *, batch_tile=None):
    """Returns (pooled, conv_out), both NCHW, matching the PyTorch module."""
    (w1, b1, g1, be1, rm1, rv1, w2, b2, g2, be2, rm2, rv2) = params
    eps = 1e-5

    B, Cin, H, W = x_nchw.shape
    Cmid = w1.shape[3]
    Cout = w2.shape[3]
    assert Cmid == Cout, "ContractingLayer uses out_channels for both convs"
    assert H % 2 == 0 and W % 2 == 0
    HW, Hq, Wq = H * W, H // 2, W // 2
    HWq = Hq * Wq

    if batch_tile is None:
        Bt, chunk = _pick_tile(B, HW, HWq)
    else:
        Bt = batch_tile
        assert B % Bt == 0, "batch_tile must divide the batch size"
        chunk = math.lcm(HWq, 128) // HWq
        if Bt % chunk != 0:
            chunk = Bt
    assert Bt % chunk == 0
    G = B // Bt
    N = Bt * HW
    Nq = Bt * HWq

    cin_p = ((Cin + 7) // 8) * 8       # pad channels to sublane multiples
    cout_p = ((Cout + 7) // 8) * 8

    f32, bf16 = jnp.float32, jnp.bfloat16

    # ---- fold BatchNorm (eval mode) into conv weights / biases; pad channels;
    # flatten the 3x3 taps into the contraction dim of a weight-stationary matmul.
    def fold(w_hwio, b, g, be, rm, rv, ci, ci_p):
        s = g / jnp.sqrt(rv + eps)
        co = w_hwio.shape[3]
        wf = (w_hwio * s[None, None, None, :]).transpose(3, 0, 1, 2)   # (co, ky, kx, ci)
        wf = wf.reshape(co, 9, ci)
        wm = jnp.zeros((cout_p, 9, ci_p), f32).at[:co, :, :ci].set(wf)
        wm = wm.reshape(cout_p, 9 * ci_p).astype(bf16)
        bc = jnp.zeros((cout_p, 1), f32).at[:co, 0].set((b - rm) * s + be)
        return wm, bc

    w1m, b1c = fold(w1, b1, g1, be1, rm1, rv1, Cin, cin_p)
    w2m, b2c = fold(w2, b2, g2, be2, rm2, rv2, Cmid, cout_p)

    # ---- per-tap validity masks over the batched lane axis (reproduce zero padding).
    pos = jnp.arange(N)
    col = (pos % HW) % W
    row = (pos % HW) // W
    mask_rows = []
    for oy in (-1, 0, 1):
        for ox in (-1, 0, 1):
            m = jnp.ones((N,), jnp.bool_)
            if oy == -1:
                m = m & (row >= 1)
            if oy == 1:
                m = m & (row <= H - 2)
            if ox == -1:
                m = m & (col >= 1)
            if ox == 1:
                m = m & (col <= W - 2)
            mask_rows.append(m)
    tapmask = jnp.stack(mask_rows).astype(f32)                         # (9, N)

    # ---- 0/1 compaction matrix gathering the top-left anchor of every 2x2 window
    # for `chunk` images at a time (chunk*HWq is a multiple of 128 -> lane-dense).
    q = jnp.arange(chunk * HWq)
    ti, r = q // HWq, q % HWq
    ii, jj = r // Wq, r % Wq
    src = ti * HW + (2 * ii) * W + 2 * jj
    sel = (jnp.arange(chunk * HW)[:, None] == src[None, :]).astype(bf16)

    # ---- inputs: channel-padded, batch tile folded onto the lane axis.
    x_p = jnp.pad(x_nchw.astype(f32), ((0, 0), (0, cin_p - Cin), (0, 0), (0, 0)))
    x_folded = x_p.reshape(G, Bt, cin_p, HW).transpose(0, 2, 1, 3).reshape(G, cin_p, N)

    const = dict(pipeline_mode=pl.Buffered(1))   # never re-fetched -> single-buffer

    grid_spec = pltpu.PrefetchScalarGridSpec(
        num_scalar_prefetch=0,
        grid=(G,),
        in_specs=[
            pl.BlockSpec((None, cin_p, N), lambda g: (g, 0, 0)),
            pl.BlockSpec((cout_p, 9 * cin_p), lambda g: (0, 0), **const),
            pl.BlockSpec((cout_p, 1), lambda g: (0, 0), **const),
            pl.BlockSpec((cout_p, 9 * cout_p), lambda g: (0, 0), **const),
            pl.BlockSpec((cout_p, 1), lambda g: (0, 0), **const),
            pl.BlockSpec((chunk * HW, chunk * HWq), lambda g: (0, 0), **const),
            pl.BlockSpec((9, N), lambda g: (0, 0), **const),
        ],
        out_specs=[
            pl.BlockSpec((None, cout_p, Nq), lambda g: (g, 0, 0)),
            pl.BlockSpec((Bt, cout_p, HW), lambda g: (g, 0, 0)),
        ],
        scratch_shapes=[
            pltpu.VMEM((9 * cin_p, N), bf16),    # conv1 im2col patch (bf16)
            pltpu.VMEM((9 * cout_p, N), bf16),   # conv2 im2col patch (bf16)
        ],
    )

    pooled_folded, y_flat = pl.pallas_call(
        functools.partial(_contracting_kernel, H=H, W=W, Bt=Bt, chunk=chunk),
        out_shape=(
            jax.ShapeDtypeStruct((G, cout_p, Nq), f32),
            jax.ShapeDtypeStruct((B, cout_p, HW), f32),
        ),
        grid_spec=grid_spec,
        compiler_params=pltpu.CompilerParams(
            # Batch tiles are independent -> shard across TensorCores on v7x.
            dimension_semantics=("parallel",)),
    )(x_folded, w1m, b1c, w2m, b2c, sel, tapmask)

    pooled = (pooled_folded.reshape(G, cout_p, Bt, HWq).transpose(0, 2, 1, 3)
              .reshape(B, cout_p, Hq, Wq)[:, :Cout])
    y = y_flat.reshape(B, cout_p, H, W)[:, :Cout]
    return pooled, y


def _ref_forward(x, params):
    """Pure-JAX reference of the same (eval-mode-BN) forward, NCHW."""
    (w1, b1, g1, be1, rm1, rv1, w2, b2, g2, be2, rm2, rv2) = params
    eps = 1e-5

    def block(x, w_hwio, b, g, be, rm, rv):
        w_oihw = jnp.transpose(w_hwio, (3, 2, 0, 1))
        y = lax.conv_general_dilated(
            x, w_oihw, window_strides=(1, 1), padding=((1, 1), (1, 1)),
            dimension_numbers=('NCHW', 'OIHW', 'NCHW'),
            precision=lax.Precision.HIGHEST)
        y = y + b[None, :, None, None]
        s = g / jnp.sqrt(rv + eps)
        y = (y - rm[None, :, None, None]) * s[None, :, None, None] \
            + be[None, :, None, None]
        return jnp.maximum(y, 0.0)

    h = block(x, w1, b1, g1, be1, rm1, rv1)
    y = block(h, w2, b2, g2, be2, rm2, rv2)
    p = lax.reduce_window(y, -jnp.inf, lax.max,
                          (1, 1, 2, 2), (1, 1, 2, 2), 'VALID')
    return p, y


def _make_params(key, cin, cmid, cout):
    ks = jax.random.split(key, 8)
    w1 = 0.1 * jax.random.normal(ks[0], (3, 3, cin, cmid), jnp.float32)   # HWIO
    b1 = 0.05 * jax.random.normal(ks[1], (cmid,), jnp.float32)
    g1 = 1.0 + 0.1 * jax.random.normal(ks[2], (cmid,), jnp.float32)
    be1 = 0.05 * jax.random.normal(ks[3], (cmid,), jnp.float32)
    rm1 = 0.05 * jax.random.normal(ks[2], (cmid,), jnp.float32)
    rv1 = 1.0 + 0.1 * jax.random.uniform(ks[3], (cmid,), jnp.float32)

    w2 = 0.1 * jax.random.normal(ks[4], (3, 3, cmid, cout), jnp.float32)  # HWIO
    b2 = 0.05 * jax.random.normal(ks[5], (cout,), jnp.float32)
    g2 = 1.0 + 0.1 * jax.random.normal(ks[6], (cout,), jnp.float32)
    be2 = 0.05 * jax.random.normal(ks[7], (cout,), jnp.float32)
    rm2 = 0.05 * jax.random.normal(ks[6], (cout,), jnp.float32)
    rv2 = 1.0 + 0.1 * jax.random.uniform(ks[7], (cout,), jnp.float32)
    return (w1, b1, g1, be1, rm1, rv1, w2, b2, g2, be2, rm2, rv2)


if __name__ == "__main__":
    B, Cin, Cout, H, W = 2, 4, 8, 16, 16
    key = jax.random.PRNGKey(0)
    kx, kp = jax.random.split(key)
    x = jax.random.normal(kx, (B, Cin, H, W), jnp.float32)
    params = _make_params(kp, Cin, Cout, Cout)

    pooled, conv_out = contracting_layer_forward(x, params)
    jax.block_until_ready((pooled, conv_out))

    assert pooled.shape == (B, Cout, H // 2, W // 2)
    assert conv_out.shape == (B, Cout, H, W)

    pooled_ref, conv_ref = _ref_forward(x, params)
    jax.block_until_ready((pooled_ref, conv_ref))
    # bf16 MXU operands (f32 accumulation) -> modest tolerance vs the f32 reference.
    assert jnp.allclose(conv_out, conv_ref, rtol=2e-2, atol=2e-2), "conv output mismatch"
    assert jnp.allclose(pooled, pooled_ref, rtol=2e-2, atol=2e-2), "pooled output mismatch"

    print("KERNEL_OK")
</pallas_src>

<mosaic_0001>
module attributes {stable_mosaic.version = 11 : i64} {
  func.func @_contracting_kernel(%arg0: i32, %arg1: memref<1x8x512xf32, #tpu.memory_space<vmem>>, %arg2: memref<8x72xbf16, #tpu.memory_space<vmem>>, %arg3: memref<8x1xf32, #tpu.memory_space<vmem>>, %arg4: memref<8x72xbf16, #tpu.memory_space<vmem>>, %arg5: memref<8x1xf32, #tpu.memory_space<vmem>>, %arg6: memref<512x128xbf16, #tpu.memory_space<vmem>>, %arg7: memref<9x512xf32, #tpu.memory_space<vmem>>, %arg8: memref<1x8x128xf32, #tpu.memory_space<vmem>>, %arg9: memref<2x8x256xf32, #tpu.memory_space<vmem>>, %arg10: memref<72x512xbf16, #tpu.memory_space<vmem>>, %arg11: memref<72x512xbf16, #tpu.memory_space<vmem>>) attributes {dimension_semantics = [#tpu.dimension_semantics<parallel>], iteration_bounds = array<i64: 1>, scalar_prefetch = 0 : i64, scratch_operands = 2 : i64, tpu.core_type = #tpu.core_type<tc>, window_params = [{transform_indices = @transform_0, window_bounds = array<i64: 1, 8, 512>}, {pipeline_mode = #tpu.pipeline_mode<synchronous>, transform_indices = @transform_1, window_bounds = array<i64: 8, 72>}, {pipeline_mode = #tpu.pipeline_mode<synchronous>, transform_indices = @transform_2, window_bounds = array<i64: 8, 1>}, {pipeline_mode = #tpu.pipeline_mode<synchronous>, transform_indices = @transform_3, window_bounds = array<i64: 8, 72>}, {pipeline_mode = #tpu.pipeline_mode<synchronous>, transform_indices = @transform_4, window_bounds = array<i64: 8, 1>}, {pipeline_mode = #tpu.pipeline_mode<synchronous>, transform_indices = @transform_5, window_bounds = array<i64: 512, 128>}, {pipeline_mode = #tpu.pipeline_mode<synchronous>, transform_indices = @transform_6, window_bounds = array<i64: 9, 512>}, {transform_indices = @transform_7, window_bounds = array<i64: 1, 8, 128>}, {transform_indices = @transform_8, window_bounds = array<i64: 2, 8, 256>}]} {
    %c0 = arith.constant 0 : index
    %c0_0 = arith.constant 0 : index
    %c0_1 = arith.constant 0 : index
    %0 = vector.load %arg1[%c0, %c0_0, %c0_1] : memref<1x8x512xf32, #tpu.memory_space<vmem>>, vector<1x8x512xf32>
    %1 = vector.shape_cast %0 : vector<1x8x512xf32> to vector<8x512xf32>
    %c0_2 = arith.constant 0 : index
    %c0_3 = arith.constant 0 : index
    %2 = vector.load %arg7[%c0_2, %c0_3] : memref<9x512xf32, #tpu.memory_space<vmem>>, vector<1x512xf32>
    %c1 = arith.constant 1 : index
    %c0_4 = arith.constant 0 : index
    %3 = vector.load %arg7[%c1, %c0_4] : memref<9x512xf32, #tpu.memory_space<vmem>>, vector<1x512xf32>
    %c2 = arith.constant 2 : index
    %c0_5 = arith.constant 0 : index
    %4 = vector.load %arg7[%c2, %c0_5] : memref<9x512xf32, #tpu.memory_space<vmem>>, vector<1x512xf32>
    %c3 = arith.constant 3 : index
    %c0_6 = arith.constant 0 : index
    %5 = vector.load %arg7[%c3, %c0_6] : memref<9x512xf32, #tpu.memory_space<vmem>>, vector<1x512xf32>
    %c5 = arith.constant 5 : index
    %c0_7 = arith.constant 0 : index
    %6 = vector.load %arg7[%c5, %c0_7] : memref<9x512xf32, #tpu.memory_space<vmem>>, vector<1x512xf32>
    %c6 = arith.constant 6 : index
    %c0_8 = arith.constant 0 : index
    %7 = vector.load %arg7[%c6, %c0_8] : memref<9x512xf32, #tpu.memory_space<vmem>>, vector<1x512xf32>
    %c7 = arith.constant 7 : index
    %c0_9 = arith.constant 0 : index
    %8 = vector.load %arg7[%c7, %c0_9] : memref<9x512xf32, #tpu.memory_space<vmem>>, vector<1x512xf32>
    %c8 = arith.constant 8 : index
    %c0_10 = arith.constant 0 : index
    %9 = vector.load %arg7[%c8, %c0_10] : memref<9x512xf32, #tpu.memory_space<vmem>>, vector<1x512xf32>
    %c17_i32 = arith.constant 17 : i32
    %10 = tpu.dynamic_rotate %1 by %c17_i32 dim 1 : vector<8x512xf32>, i32 -> vector<8x512xf32>
    %cst = arith.constant 5.000000e-01 : f32
    %11 = vector.broadcast %cst : f32 to vector<1x512xf32>
    %12 = arith.cmpf ogt, %2, %11 : vector<1x512xf32>
    %cst_11 = arith.constant 0.000000e+00 : f32
    %13 = vector.shape_cast %12 : vector<1x512xi1> to vector<1x512xi1>
    %14 = vector.broadcast %13 : vector<1x512xi1> to vector<8x512xi1>
    %15 = vector.broadcast %cst_11 : f32 to vector<8x512xf32>
    %16 = arith.select %14, %10, %15 : vector<8x512xi1>, vector<8x512xf32>
    %17 = arith.truncf %16 : vector<8x512xf32> to vector<8x512xbf16>
    %c0_12 = arith.constant 0 : index
    %c0_13 = arith.constant 0 : index
    %18 = vector.load %arg10[%c0_12, %c0_13] : memref<72x512xbf16, #tpu.memory_space<vmem>>, vector<8x512xbf16>
    tpu.vector_store %arg10[%c0_12, %c0_13], %17 {strides = array<i32>} : memref<72x512xbf16, #tpu.memory_space<vmem>>, vector<8x512xbf16>,
    %c16_i32 = arith.constant 16 : i32
    %19 = tpu.dynamic_rotate %1 by %c16_i32 dim 1 : vector<8x512xf32>, i32 -> vector<8x512xf32>
    %cst_14 = arith.constant 5.000000e-01 : f32
    %20 = vector.broadcast %cst_14 : f32 to vector<1x512xf32>
    %21 = arith.cmpf ogt, %3, %20 : vector<1x512xf32>
    %cst_15 = arith.constant 0.000000e+00 : f32
    %22 = vector.shape_cast %21 : vector<1x512xi1> to vector<1x512xi1>
    %23 = vector.broadcast %22 : vector<1x512xi1> to vector<8x512xi1>
    %24 = vector.broadcast %cst_15 : f32 to vector<8x512xf32>
    %25 = arith.select %23, %19, %24 : vector<8x512xi1>, vector<8x512xf32>
    %26 = arith.truncf %25 : vector<8x512xf32> to vector<8x512xbf16>
    %c8_16 = arith.constant 8 : index
    %c0_17 = arith.constant 0 : index
    %27 = vector.load %arg10[%c8_16, %c0_17] : memref<72x512xbf16, #tpu.memory_space<vmem>>, vector<8x512xbf16>
    tpu.vector_store %arg10[%c8_16, %c0_17], %26 {strides = array<i32>} : memref<72x512xbf16, #tpu.memory_space<vmem>>, vector<8x512xbf16>,
    %c15_i32 = arith.constant 15 : i32
    %28 = tpu.dynamic_rotate %1 by %c15_i32 dim 1 : vector<8x512xf32>, i32 -> vector<8x512xf32>
    %cst_18 = arith.constant 5.000000e-01 : f32
    %29 = vector.broadcast %cst_18 : f32 to vector<1x512xf32>
    %30 = arith.cmpf ogt, %4, %29 : vector<1x512xf32>
    %cst_19 = arith.constant 0.000000e+00 : f32
    %31 = vector.shape_cast %30 : vector<1x512xi1> to vector<1x512xi1>
    %32 = vector.broadcast %31 : vector<1x512xi1> to vector<8x512xi1>
    %33 = vector.broadcast %cst_19 : f32 to vector<8x512xf32>
    %34 = arith.select %32, %28, %33 : vector<8x512xi1>, vector<8x512xf32>
    %35 = arith.truncf %34 : vector<8x512xf32> to vector<8x512xbf16>
    %c16 = arith.constant 16 : index
    %c0_20 = arith.constant 0 : index
    %36 = vector.load %arg10[%c16, %c0_20] : memref<72x512xbf16, #tpu.memory_space<vmem>>, vector<8x512xbf16>
    tpu.vector_store %arg10[%c16, %c0_20], %35 {strides = array<i32>} : memref<72x512xbf16, #tpu.memory_space<vmem>>, vector<8x512xbf16>,
    %c1_i32 = arith.constant 1 : i32
    %37 = tpu.dynamic_rotate %1 by %c1_i32 dim 1 : vector<8x512xf32>, i32 -> vector<8x512xf32>
    %cst_21 = arith.constant 5.000000e-01 : f32
    %38 = vector.broadcast %cst_21 : f32 to vector<1x512xf32>
    %39 = arith.cmpf ogt, %5, %38 : vector<1x512xf32>
    %cst_22 = arith.constant 0.000000e+00 : f32
    %40 = vector.shape_cast %39 : vector<1x512xi1> to vector<1x512xi1>
    %41 = vector.broadcast %40 : vector<1x512xi1> to vector<8x512xi1>
    %42 = vector.broadcast %cst_22 : f32 to vector<8x512xf32>
    %43 = arith.select %41, %37, %42 : vector<8x512xi1>, vector<8x512xf32>
    %44 = arith.truncf %43 : vector<8x512xf32> to vector<8x512xbf16>
    %c24 = arith.constant 24 : index
    %c0_23 = arith.constant 0 : index
    %45 = vector.load %arg10[%c24, %c0_23] : memref<72x512xbf16, #tpu.memory_space<vmem>>, vector<8x512xbf16>
    tpu.vector_store %arg10[%c24, %c0_23], %44 {strides = array<i32>} : memref<72x512xbf16, #tpu.memory_space<vmem>>, vector<8x512xbf16>,
    %46 = arith.truncf %1 : vector<8x512xf32> to vector<8x512xbf16>
    %c32 = arith.constant 32 : index
    %c0_24 = arith.constant 0 : index
    %47 = vector.load %arg10[%c32, %c0_24] : memref<72x512xbf16, #tpu.memory_space<vmem>>, vector<8x512xbf16>
    tpu.vector_store %arg10[%c32, %c0_24], %46 {strides = array<i32>} : memref<72x512xbf16, #tpu.memory_space<vmem>>, vector<8x512xbf16>,
    %c511_i32 = arith.constant 511 : i32
    %48 = tpu.dynamic_rotate %1 by %c511_i32 dim 1 : vector<8x512xf32>, i32 -> vector<8x512xf32>
    %cst_25 = arith.constant 5.000000e-01 : f32
    %49 = vector.broadcast %cst_25 : f32 to vector<1x512xf32>
    %50 = arith.cmpf ogt, %6, %49 : vector<1x512xf32>
    %cst_26 = arith.constant 0.000000e+00 : f32
    %51 = vector.shape_cast %50 : vector<1x512xi1> to vector<1x512xi1>
    %52 = vector.broadcast %51 : vector<1x512xi1> to vector<8x512xi1>
    %53 = vector.broadcast %cst_26 : f32 to vector<8x512xf32>
    %54 = arith.select %52, %48, %53 : vector<8x512xi1>, vector<8x512xf32>
    %55 = arith.truncf %54 : vector<8x512xf32> to vector<8x512xbf16>
    %c40 = arith.constant 40 : index
    %c0_27 = arith.constant 0 : index
    %56 = vector.load %arg10[%c40, %c0_27] : memref<72x512xbf16, #tpu.memory_space<vmem>>, vector<8x512xbf16>
    tpu.vector_store %arg10[%c40, %c0_27], %55 {strides = array<i32>} : memref<72x512xbf16, #tpu.memory_space<vmem>>, vector<8x512xbf16>,
    %c497_i32 = arith.constant 497 : i32
    %57 = tpu.dynamic_rotate %1 by %c497_i32 dim 1 : vector<8x512xf32>, i32 -> vector<8x512xf32>
    %cst_28 = arith.constant 5.000000e-01 : f32
    %58 = vector.broadcast %cst_28 : f32 to vector<1x512xf32>
    %59 = arith.cmpf ogt, %7, %58 : vector<1x512xf32>
    %cst_29 = arith.constant 0.000000e+00 : f32
    %60 = vector.shape_cast %59 : vector<1x512xi1> to vector<1x512xi1>
    %61 = vector.broadcast %60 : vector<1x512xi1> to vector<8x512xi1>
    %62 = vector.broadcast %cst_29 : f32 to vector<8x512xf32>
    %63 = arith.select %61, %57, %62 : vector<8x512xi1>, vector<8x512xf32>
    %64 = arith.truncf %63 : vector<8x512xf32> to vector<8x512xbf16>
    %c48 = arith.constant 48 : index
    %c0_30 = arith.constant 0 : index
    %65 = vector.load %arg10[%c48, %c0_30] : memref<72x512xbf16, #tpu.memory_space<vmem>>, vector<8x512xbf16>
    tpu.vector_store %arg10[%c48, %c0_30], %64 {strides = array<i32>} : memref<72x512xbf16, #tpu.memory_space<vmem>>, vector<8x512xbf16>,
    %c496_i32 = arith.constant 496 : i32
    %66 = tpu.dynamic_rotate %1 by %c496_i32 dim 1 : vector<8x512xf32>, i32 -> vector<8x512xf32>
    %cst_31 = arith.constant 5.000000e-01 : f32
    %67 = vector.broadcast %cst_31 : f32 to vector<1x512xf32>
    %68 = arith.cmpf ogt, %8, %67 : vector<1x512xf32>
    %cst_32 = arith.constant 0.000000e+00 : f32
    %69 = vector.shape_cast %68 : vector<1x512xi1> to vector<1x512xi1>
    %70 = vector.broadcast %69 : vector<1x512xi1> to vector<8x512xi1>
    %71 = vector.broadcast %cst_32 : f32 to vector<8x512xf32>
    %72 = arith.select %70, %66, %71 : vector<8x512xi1>, vector<8x512xf32>
    %73 = arith.truncf %72 : vector<8x512xf32> to vector<8x512xbf16>
    %c56 = arith.constant 56 : index
    %c0_33 = arith.constant 0 : index
    %74 = vector.load %arg10[%c56, %c0_33] : memref<72x512xbf16, #tpu.memory_space<vmem>>, vector<8x512xbf16>
    tpu.vector_store %arg10[%c56, %c0_33], %73 {strides = array<i32>} : memref<72x512xbf16, #tpu.memory_space<vmem>>, vector<8x512xbf16>,
    %c495_i32 = arith.constant 495 : i32
    %75 = tpu.dynamic_rotate %1 by %c495_i32 dim 1 : vector<8x512xf32>, i32 -> vector<8x512xf32>
    %cst_34 = arith.constant 5.000000e-01 : f32
    %76 = vector.broadcast %cst_34 : f32 to vector<1x512xf32>
    %77 = arith.cmpf ogt, %9, %76 : vector<1x512xf32>
    %cst_35 = arith.constant 0.000000e+00 : f32
    %78 = vector.shape_cast %77 : vector<1x512xi1> to vector<1x512xi1>
    %79 = vector.broadcast %78 : vector<1x512xi1> to vector<8x512xi1>
    %80 = vector.broadcast %cst_35 : f32 to vector<8x512xf32>
    %81 = arith.select %79, %75, %80 : vector<8x512xi1>, vector<8x512xf32>
    %82 = arith.truncf %81 : vector<8x512xf32> to vector<8x512xbf16>
    %c64 = arith.constant 64 : index
    %c0_36 = arith.constant 0 : index
    %83 = vector.load %arg10[%c64, %c0_36] : memref<72x512xbf16, #tpu.memory_space<vmem>>, vector<8x512xbf16>
    tpu.vector_store %arg10[%c64, %c0_36], %82 {strides = array<i32>} : memref<72x512xbf16, #tpu.memory_space<vmem>>, vector<8x512xbf16>,
    %c0_37 = arith.constant 0 : index
    %c0_38 = arith.constant 0 : index
    %84 = vector.load %arg2[%c0_37, %c0_38] : memref<8x72xbf16, #tpu.memory_space<vmem>>, vector<8x72xbf16>
    %c0_39 = arith.constant 0 : index
    %c0_40 = arith.constant 0 : index
    %85 = vector.load %arg10[%c0_39, %c0_40] : memref<72x512xbf16, #tpu.memory_space<vmem>>, vector<72x512xbf16>
    %cst_41 = arith.constant dense<0.000000e+00> : vector<8x512xf32>
    %86 = tpu.matmul %84, %85, %cst_41 {dimension_numbers = #tpu.dot_dimension_numbers<[1], [0], [0], [1], [0, 0, 1, 1], [], []>} : vector<8x72xbf16>, vector<72x512xbf16>, vector<8x512xf32> -> vector<8x512xf32>
    %c0_42 = arith.constant 0 : index
    %c0_43 = arith.constant 0 : index
    %87 = vector.load %arg3[%c0_42, %c0_43] : memref<8x1xf32, #tpu.memory_space<vmem>>, vector<8x1xf32>
    %88 = vector.broadcast %87 : vector<8x1xf32> to vector<8x512xf32>
    %89 = arith.addf %86, %88 : vector<8x512xf32>
    %cst_44 = arith.constant 0.000000e+00 : f32
    %90 = vector.broadcast %cst_44 : f32 to vector<8x512xf32>
    %91 = arith.maximumf %89, %90 : vector<8x512xf32>
    %c17_i32_45 = arith.constant 17 : i32
    %92 = tpu.dynamic_rotate %91 by %c17_i32_45 dim 1 : vector<8x512xf32>, i32 -> vector<8x512xf32>
    %cst_46 = arith.constant 5.000000e-01 : f32
    %93 = vector.broadcast %cst_46 : f32 to vector<1x512xf32>
    %94 = arith.cmpf ogt, %2, %93 : vector<1x512xf32>
    %cst_47 = arith.constant 0.000000e+00 : f32
    %95 = vector.shape_cast %94 : vector<1x512xi1> to vector<1x512xi1>
    %96 = vector.broadcast %95 : vector<1x512xi1> to vector<8x512xi1>
    %97 = vector.broadcast %cst_47 : f32 to vector<8x512xf32>
    %98 = arith.select %96, %92, %97 : vector<8x512xi1>, vector<8x512xf32>
    %99 = arith.truncf %98 : vector<8x512xf32> to vector<8x512xbf16>
    %c0_48 = arith.constant 0 : index
    %c0_49 = arith.constant 0 : index
    %100 = vector.load %arg11[%c0_48, %c0_49] : memref<72x512xbf16, #tpu.memory_space<vmem>>, vector<8x512xbf16>
    tpu.vector_store %arg11[%c0_48, %c0_49], %99 {strides = array<i32>} : memref<72x512xbf16, #tpu.memory_space<vmem>>, vector<8x512xbf16>,
    %c16_i32_50 = arith.constant 16 : i32
    %101 = tpu.dynamic_rotate %91 by %c16_i32_50 dim 1 : vector<8x512xf32>, i32 -> vector<8x512xf32>
    %cst_51 = arith.constant 5.000000e-01 : f32
    %102 = vector.broadcast %cst_51 : f32 to vector<1x512xf32>
    %103 = arith.cmpf ogt, %3, %102 : vector<1x512xf32>
    %cst_52 = arith.constant 0.000000e+00 : f32
    %104 = vector.shape_cast %103 : vector<1x512xi1> to vector<1x512xi1>
    %105 = vector.broadcast %104 : vector<1x512xi1> to vector<8x512xi1>
    %106 = vector.broadcast %cst_52 : f32 to vector<8x512xf32>
    %107 = arith.select %105, %101, %106 : vector<8x512xi1>, vector<8x512xf32>
    %108 = arith.truncf %107 : vector<8x512xf32> to vector<8x512xbf16>
    %c8_53 = arith.constant 8 : index
    %c0_54 = arith.constant 0 : index
    %109 = vector.load %arg11[%c8_53, %c0_54] : memref<72x512xbf16, #tpu.memory_space<vmem>>, vector<8x512xbf16>
    tpu.vector_store %arg11[%c8_53, %c0_54], %108 {strides = array<i32>} : memref<72x512xbf16, #tpu.memory_space<vmem>>, vector<8x512xbf16>,
    %c15_i32_55 = arith.constant 15 : i32
    %110 = tpu.dynamic_rotate %91 by %c15_i32_55 dim 1 : vector<8x512xf32>, i32 -> vector<8x512xf32>
    %cst_56 = arith.constant 5.000000e-01 : f32
    %111 = vector.broadcast %cst_56 : f32 to vector<1x512xf32>
    %112 = arith.cmpf ogt, %4, %111 : vector<1x512xf32>
    %cst_57 = arith.constant 0.000000e+00 : f32
    %113 = vector.shape_cast %112 : vector<1x512xi1> to vector<1x512xi1>
    %114 = vector.broadcast %113 : vector<1x512xi1> to vector<8x512xi1>
    %115 = vector.broadcast %cst_57 : f32 to vector<8x512xf32>
    %116 = arith.select %114, %110, %115 : vector<8x512xi1>, vector<8x512xf32>
    %117 = arith.truncf %116 : vector<8x512xf32> to vector<8x512xbf16>
    %c16_58 = arith.constant 16 : index
    %c0_59 = arith.constant 0 : index
    %118 = vector.load %arg11[%c16_58, %c0_59] : memref<72x512xbf16, #tpu.memory_space<vmem>>, vector<8x512xbf16>
    tpu.vector_store %arg11[%c16_58, %c0_59], %117 {strides = array<i32>} : memref<72x512xbf16, #tpu.memory_space<vmem>>, vector<8x512xbf16>,
    %c1_i32_60 = arith.constant 1 : i32
    %119 = tpu.dynamic_rotate %91 by %c1_i32_60 dim 1 : vector<8x512xf32>, i32 -> vector<8x512xf32>
    %cst_61 = arith.constant 5.000000e-01 : f32
    %120 = vector.broadcast %cst_61 : f32 to vector<1x512xf32>
    %121 = arith.cmpf ogt, %5, %120 : vector<1x512xf32>
    %cst_62 = arith.constant 0.000000e+00 : f32
    %122 = vector.shape_cast %121 : vector<1x512xi1> to vector<1x512xi1>
    %123 = vector.broadcast %122 : vector<1x512xi1> to vector<8x512xi1>
    %124 = vector.broadcast %cst_62 : f32 to vector<8x512xf32>
    %125 = arith.select %123, %119, %124 : vector<8x512xi1>, vector<8x512xf32>
    %126 = arith.truncf %125 : vector<8x512xf32> to vector<8x512xbf16>
    %c24_63 = arith.constant 24 : index
    %c0_64 = arith.constant 0 : index
    %127 = vector.load %arg11[%c24_63, %c0_64] : memref<72x512xbf16, #tpu.memory_space<vmem>>, vector<8x512xbf16>
    tpu.vector_store %arg11[%c24_63, %c0_64], %126 {strides = array<i32>} : memref<72x512xbf16, #tpu.memory_space<vmem>>, vector<8x512xbf16>,
    %128 = arith.truncf %91 : vector<8x512xf32> to vector<8x512xbf16>
    %c32_65 = arith.constant 32 : index
    %c0_66 = arith.constant 0 : index
    %129 = vector.load %arg11[%c32_65, %c0_66] : memref<72x512xbf16, #tpu.memory_space<vmem>>, vector<8x512xbf16>
    tpu.vector_store %arg11[%c32_65, %c0_66], %128 {strides = array<i32>} : memref<72x512xbf16, #tpu.memory_space<vmem>>, vector<8x512xbf16>,
    %c511_i32_67 = arith.constant 511 : i32
    %130 = tpu.dynamic_rotate %91 by %c511_i32_67 dim 1 : vector<8x512xf32>, i32 -> vector<8x512xf32>
    %cst_68 = arith.constant 5.000000e-01 : f32
    %131 = vector.broadcast %cst_68 : f32 to vector<1x512xf32>
    %132 = arith.cmpf ogt, %6, %131 : vector<1x512xf32>
    %cst_69 = arith.constant 0.000000e+00 : f32
    %133 = vector.shape_cast %132 : vector<1x512xi1> to vector<1x512xi1>
    %134 = vector.broadcast %133 : vector<1x512xi1> to vector<8x512xi1>
    %135 = vector.broadcast %cst_69 : f32 to vector<8x512xf32>
    %136 = arith.select %134, %130, %135 : vector<8x512xi1>, vector<8x512xf32>
    %137 = arith.truncf %136 : vector<8x512xf32> to vector<8x512xbf16>
    %c40_70 = arith.constant 40 : index
    %c0_71 = arith.constant 0 : index
    %138 = vector.load %arg11[%c40_70, %c0_71] : memref<72x512xbf16, #tpu.memory_space<vmem>>, vector<8x512xbf16>
    tpu.vector_store %arg11[%c40_70, %c0_71], %137 {strides = array<i32>} : memref<72x512xbf16, #tpu.memory_space<vmem>>, vector<8x512xbf16>,
    %c497_i32_72 = arith.constant 497 : i32
    %139 = tpu.dynamic_rotate %91 by %c497_i32_72 dim 1 : vector<8x512xf32>, i32 -> vector<8x512xf32>
    %cst_73 = arith.constant 5.000000e-01 : f32
    %140 = vector.broadcast %cst_73 : f32 to vector<1x512xf32>
    %141 = arith.cmpf ogt, %7, %140 : vector<1x512xf32>
    %cst_74 = arith.constant 0.000000e+00 : f32
    %142 = vector.shape_cast %141 : vector<1x512xi1> to vector<1x512xi1>
    %143 = vector.broadcast %142 : vector<1x512xi1> to vector<8x512xi1>
    %144 = vector.broadcast %cst_74 : f32 to vector<8x512xf32>
    %145 = arith.select %143, %139, %144 : vector<8x512xi1>, vector<8x512xf32>
    %146 = arith.truncf %145 : vector<8x512xf32> to vector<8x512xbf16>
    %c48_75 = arith.constant 48 : index
    %c0_76 = arith.constant 0 : index
    %147 = vector.load %arg11[%c48_75, %c0_76] : memref<72x512xbf16, #tpu.memory_space<vmem>>, vector<8x512xbf16>
    tpu.vector_store %arg11[%c48_75, %c0_76], %146 {strides = array<i32>} : memref<72x512xbf16, #tpu.memory_space<vmem>>, vector<8x512xbf16>,
    %c496_i32_77 = arith.constant 496 : i32
    %148 = tpu.dynamic_rotate %91 by %c496_i32_77 dim 1 : vector<8x512xf32>, i32 -> vector<8x512xf32>
    %cst_78 = arith.constant 5.000000e-01 : f32
    %149 = vector.broadcast %cst_78 : f32 to vector<1x512xf32>
    %150 = arith.cmpf ogt, %8, %149 : vector<1x512xf32>
    %cst_79 = arith.constant 0.000000e+00 : f32
    %151 = vector.shape_cast %150 : vector<1x512xi1> to vector<1x512xi1>
    %152 = vector.broadcast %151 : vector<1x512xi1> to vector<8x512xi1>
    %153 = vector.broadcast %cst_79 : f32 to vector<8x512xf32>
    %154 = arith.select %152, %148, %153 : vector<8x512xi1>, vector<8x512xf32>
    %155 = arith.truncf %154 : vector<8x512xf32> to vector<8x512xbf16>
    %c56_80 = arith.constant 56 : index
    %c0_81 = arith.constant 0 : index
    %156 = vector.load %arg11[%c56_80, %c0_81] : memref<72x512xbf16, #tpu.memory_space<vmem>>, vector<8x512xbf16>
    tpu.vector_store %arg11[%c56_80, %c0_81], %155 {strides = array<i32>} : memref<72x512xbf16, #tpu.memory_space<vmem>>, vector<8x512xbf16>,
    %c495_i32_82 = arith.constant 495 : i32
    %157 = tpu.dynamic_rotate %91 by %c495_i32_82 dim 1 : vector<8x512xf32>, i32 -> vector<8x512xf32>
    %cst_83 = arith.constant 5.000000e-01 : f32
    %158 = vector.broadcast %cst_83 : f32 to vector<1x512xf32>
    %159 = arith.cmpf ogt, %9, %158 : vector<1x512xf32>
    %cst_84 = arith.constant 0.000000e+00 : f32
    %160 = vector.shape_cast %159 : vector<1x512xi1> to vector<1x512xi1>
    %161 = vector.broadcast %160 : vector<1x512xi1> to vector<8x512xi1>
    %162 = vector.broadcast %cst_84 : f32 to vector<8x512xf32>
    %163 = arith.select %161, %157, %162 : vector<8x512xi1>, vector<8x512xf32>
    %164 = arith.truncf %163 : vector<8x512xf32> to vector<8x512xbf16>
    %c64_85 = arith.constant 64 : index
    %c0_86 = arith.constant 0 : index
    %165 = vector.load %arg11[%c64_85, %c0_86] : memref<72x512xbf16, #tpu.memory_space<vmem>>, vector<8x512xbf16>
    tpu.vector_store %arg11[%c64_85, %c0_86], %164 {strides = array<i32>} : memref<72x512xbf16, #tpu.memory_space<vmem>>, vector<8x512xbf16>,
    %c0_87 = arith.constant 0 : index
    %c0_88 = arith.constant 0 : index
    %166 = vector.load %arg4[%c0_87, %c0_88] : memref<8x72xbf16, #tpu.memory_space<vmem>>, vector<8x72xbf16>
    %c0_89 = arith.constant 0 : index
    %c0_90 = arith.constant 0 : index
    %167 = vector.load %arg11[%c0_89, %c0_90] : memref<72x512xbf16, #tpu.memory_space<vmem>>, vector<72x512xbf16>
    %cst_91 = arith.constant dense<0.000000e+00> : vector<8x512xf32>
    %168 = tpu.matmul %166, %167, %cst_91 {dimension_numbers = #tpu.dot_dimension_numbers<[1], [0], [0], [1], [0, 0, 1, 1], [], []>} : vector<8x72xbf16>, vector<72x512xbf16>, vector<8x512xf32> -> vector<8x512xf32>
    %c0_92 = arith.constant 0 : index
    %c0_93 = arith.constant 0 : index
    %169 = vector.load %arg5[%c0_92, %c0_93] : memref<8x1xf32, #tpu.memory_space<vmem>>, vector<8x1xf32>
    %170 = vector.broadcast %169 : vector<8x1xf32> to vector<8x512xf32>
    %171 = arith.addf %168, %170 : vector<8x512xf32>
    %cst_94 = arith.constant 0.000000e+00 : f32
    %172 = vector.broadcast %cst_94 : f32 to vector<8x512xf32>
    %173 = arith.maximumf %171, %172 : vector<8x512xf32>
    %174 = vector.extract_strided_slice %173 {offsets = [0, 0], sizes = [8, 256], strides = [1, 1]} : vector<8x512xf32> to vector<8x256xf32>
    %c0_95 = arith.constant 0 : index
    %c0_96 = arith.constant 0 : index
    %c0_97 = arith.constant 0 : index
    %175 = vector.load %arg9[%c0_95, %c0_96, %c0_97] : memref<2x8x256xf32, #tpu.memory_space<vmem>>, vector<1x8x256xf32>
    %176 = vector.shape_cast %175 : vector<1x8x256xf32> to vector<8x256xf32>
    %177 = vector.shape_cast %174 : vector<8x256xf32> to vector<1x8x256xf32>
    tpu.vector_store %arg9[%c0_95, %c0_96, %c0_97], %177 {strides = array<i32>} : memref<2x8x256xf32, #tpu.memory_space<vmem>>, vector<1x8x256xf32>,
    %178 = vector.extract_strided_slice %173 {offsets = [0, 256], sizes = [8, 256], strides = [1, 1]} : vector<8x512xf32> to vector<8x256xf32>
    %c1_98 = arith.constant 1 : index
    %c0_99 = arith.constant 0 : index
    %c0_100 = arith.constant 0 : index
    %179 = vector.load %arg9[%c1_98, %c0_99, %c0_100] : memref<2x8x256xf32, #tpu.memory_space<vmem>>, vector<1x8x256xf32>
    %180 = vector.shape_cast %179 : vector<1x8x256xf32> to vector<8x256xf32>
    %181 = vector.shape_cast %178 : vector<8x256xf32> to vector<1x8x256xf32>
    tpu.vector_store %arg9[%c1_98, %c0_99, %c0_100], %181 {strides = array<i32>} : memref<2x8x256xf32, #tpu.memory_space<vmem>>, vector<1x8x256xf32>,
    %c511_i32_101 = arith.constant 511 : i32
    %182 = tpu.dynamic_rotate %173 by %c511_i32_101 dim 1 : vector<8x512xf32>, i32 -> vector<8x512xf32>
    %183 = arith.maximumf %173, %182 : vector<8x512xf32>
    %c496_i32_102 = arith.constant 496 : i32
    %184 = tpu.dynamic_rotate %183 by %c496_i32_102 dim 1 : vector<8x512xf32>, i32 -> vector<8x512xf32>
    %185 = arith.maximumf %183, %184 : vector<8x512xf32>
    %c0_103 = arith.constant 0 : index
    %c0_104 = arith.constant 0 : index
    %186 = vector.load %arg6[%c0_103, %c0_104] : memref<512x128xbf16, #tpu.memory_space<vmem>>, vector<512x128xbf16>
    %187 = arith.truncf %185 : vector<8x512xf32> to vector<8x512xbf16>
    %cst_105 = arith.constant dense<0.000000e+00> : vector<8x128xf32>
    %188 = tpu.matmul %187, %186, %cst_105 {dimension_numbers = #tpu.dot_dimension_numbers<[1], [0], [0], [1], [0, 0, 1, 1], [], []>} : vector<8x512xbf16>, vector<512x128xbf16>, vector<8x128xf32> -> vector<8x128xf32>
    %c0_106 = arith.constant 0 : index
    %c0_107 = arith.constant 0 : index
    %c0_108 = arith.constant 0 : index
    %189 = vector.load %arg8[%c0_106, %c0_107, %c0_108] : memref<1x8x128xf32, #tpu.memory_space<vmem>>, vector<1x8x128xf32>
    %190 = vector.shape_cast %189 : vector<1x8x128xf32> to vector<8x128xf32>
    %191 = vector.shape_cast %188 : vector<8x128xf32> to vector<1x8x128xf32>
    tpu.vector_store %arg8[%c0_106, %c0_107, %c0_108], %191 {strides = array<i32>} : memref<1x8x128xf32, #tpu.memory_space<vmem>>, vector<1x8x128xf32>,
    return
  }
  func.func @transform_0(%arg0: i32) -> (i32, i32, i32) {
    %c0_i32 = arith.constant 0 : i32
    %c0_i32_0 = arith.constant 0 : i32
    %c0_i32_1 = arith.constant 0 : i32
    return %arg0, %c0_i32, %c0_i32_0 : i32, i32, i32
  }
  func.func @transform_1(%arg0: i32) -> (i32, i32) {
    %c0_i32 = arith.constant 0 : i32
    %c0_i32_0 = arith.constant 0 : i32
    %c0_i32_1 = arith.constant 0 : i32
    return %c0_i32, %c0_i32_0 : i32, i32
  }
  func.func @transform_2(%arg0: i32) -> (i32, i32) {
    %c0_i32 = arith.constant 0 : i32
    %c0_i32_0 = arith.constant 0 : i32
    %c0_i32_1 = arith.constant 0 : i32
    return %c0_i32, %c0_i32_0 : i32, i32
  }
  func.func @transform_3(%arg0: i32) -> (i32, i32) {
    %c0_i32 = arith.constant 0 : i32
    %c0_i32_0 = arith.constant 0 : i32
    %c0_i32_1 = arith.constant 0 : i32
    return %c0_i32, %c0_i32_0 : i32, i32
  }
  func.func @transform_4(%arg0: i32) -> (i32, i32) {
    %c0_i32 = arith.constant 0 : i32
    %c0_i32_0 = arith.constant 0 : i32
    %c0_i32_1 = arith.constant 0 : i32
    return %c0_i32, %c0_i32_0 : i32, i32
  }
  func.func @transform_5(%arg0: i32) -> (i32, i32) {
    %c0_i32 = arith.constant 0 : i32
    %c0_i32_0 = arith.constant 0 : i32
    %c0_i32_1 = arith.constant 0 : i32
    return %c0_i32, %c0_i32_0 : i32, i32
  }
  func.func @transform_6(%arg0: i32) -> (i32, i32) {
    %c0_i32 = arith.constant 0 : i32
    %c0_i32_0 = arith.constant 0 : i32
    %c0_i32_1 = arith.constant 0 : i32
    return %c0_i32, %c0_i32_0 : i32, i32
  }
  func.func @transform_7(%arg0: i32) -> (i32, i32, i32) {
    %c0_i32 = arith.constant 0 : i32
    %c0_i32_0 = arith.constant 0 : i32
    %c0_i32_1 = arith.constant 0 : i32
    return %arg0, %c0_i32, %c0_i32_0 : i32, i32, i32
  }
  func.func @transform_8(%arg0: i32) -> (i32, i32, i32) {
    %c0_i32 = arith.constant 0 : i32
    %c0_i32_0 = arith.constant 0 : i32
    %c0_i32_1 = arith.constant 0 : i32
    return %arg0, %c0_i32, %c0_i32_0 : i32, i32, i32
  }
}

</mosaic_0001>

<llo_original>
// kernel: tpu_custom_call.1
$region0: #{tpu_custom_call.1}
  #allocation0 [shape = 'u32[]', space=smem, size = 0x4, offset = 0x4, fixed_abs, tag = 'smem constant byte address 0x4 - core index']
  #allocation1 [shape = 'u32[72,128]{1,0:T(1,128)}', space=vmem, size = 0x9000, scoped, tag = 'internal scratch']
  #allocation2 [shape = 'bf16[72,512]{1,0:T(8,128)(2,1)}', space=vmem, size = 0x12000, scoped, tag = 'scratch operand']
  #allocation3 [shape = 'bf16[72,512]{1,0:T(8,128)(2,1)}', space=vmem, size = 0x12000, scoped, tag = 'scratch operand']
  %s0 = inlined_call_operand.hbm [shape: f32[1,8,512], index: 0, kind: input, shape index: {}]
  %s1 = inlined_call_operand.vmem [shape: bf16[8,72], index: 1, kind: input, shape index: {}]
  %s2 = inlined_call_operand.vmem [shape: f32[8,1], index: 2, kind: input, shape index: {}]
  %s3 = inlined_call_operand.vmem [shape: bf16[8,72], index: 3, kind: input, shape index: {}]
  %s4 = inlined_call_operand.vmem [shape: f32[8,1], index: 4, kind: input, shape index: {}]
  %s5 = inlined_call_operand.hbm [shape: bf16[512,128], index: 5, kind: input, shape index: {}]
  %s6 = inlined_call_operand.hbm [shape: f32[9,512], index: 6, kind: input, shape index: {}]
  %s7 = inlined_call_operand.hbm [shape: f32[1,8,128], index: 7, kind: output, shape index: {0}]
  %s8 = inlined_call_operand.hbm [shape: f32[2,8,256], index: 8, kind: output, shape index: {1}]
  %9 = xla_tuple %s7, %s8
  %s10 = sld [smem:[#allocation0]]
  $region58: #{tpu_custom_call.1} parent=0
    _
  %s12 = ssub.s32 1, %s10
  %s13 = scalar_select 0, %s12, %s10
  $region1: #{tpu_custom_call.1} parent=0
    #allocation4 [shape = 'u8[16384]{0}', space=vmem, size = 0x4000, scoped, tag = 'input window, operand 0, single buffered']
    #allocation5 [shape = 's32[1]{0}', space=sflag, size = 0x4, scoped, tag = 'scoped memory for tpu_custom_call.1']
    #allocation6 [shape = 's32[1]{0}', space=sflag, size = 0x4, scoped, tag = 'scoped memory for tpu_custom_call.1']
    #allocation7 [shape = 'u8[131072]{0}', space=vmem, size = 0x20000, scoped, tag = 'input window, operand 5, single buffered']
    #allocation8 [shape = 's32[1]{0}', space=sflag, size = 0x4, scoped, tag = 'scoped memory for tpu_custom_call.1']
    #allocation9 [shape = 'u8[32768]{0}', space=vmem, size = 0x8000, scoped, tag = 'input window, operand 6, single buffered']
    #allocation10 [shape = 'u8[4096]{0}', space=vmem, size = 0x1000, scoped, tag = 'output window, operand 0, single buffered']
    #allocation11 [shape = 'u8[16384]{0}', space=vmem, size = 0x4000, scoped, tag = 'output window, operand 1, single buffered']
    #allocation12 [shape = 's32[1]{0}', space=sflag, size = 0x4, scoped, tag = 'scoped memory for tpu_custom_call.1']
    %14 = vsyncpa [#allocation5], 0
    %15 = vsyncpa [#allocation8], 0
    %16 = vsyncpa [#allocation6], 0
    %17 = vsyncpa [#allocation12], 0
    // Predicated region
    $region2: #{tpu_custom_call.1} parent=1 // pred_check
      _
    $region3: #{tpu_custom_call.1} parent=1 // pred_check_branch
      %19 = sbr.rel (0) target = $region5
    $region4: #{tpu_custom_call.1} parent=1 // pred_region
      %21 = vsyncadd [#allocation5], 0
      %s23 = sshll.u32 %s0, 4
      %s24 = int_to_ptr.hbm [resolvable:$true] %s23
      %s25 = sshll.u32 [#allocation4], 4
      %s26 = int_to_ptr.vmem [resolvable:$true] %s25
      %28 = dma.hbm_to_vmem [thread:$0]  %s24, 512, %s26, [#allocation5]
    $region5: #{tpu_custom_call.1} parent=1 // pred_fallthru
      _
    // Predicated region
    $region6: #{tpu_custom_call.1} parent=1 // pred_check
      _
    $region7: #{tpu_custom_call.1} parent=1 // pred_check_branch
      %30 = sbr.rel (0) target = $region9
    $region8: #{tpu_custom_call.1} parent=1 // pred_region
      _
    $region9: #{tpu_custom_call.1} parent=1 // pred_fallthru
      _
    // Predicated region
    $region10: #{tpu_custom_call.1} parent=1 // pred_check
      _
    $region11: #{tpu_custom_call.1} parent=1 // pred_check_branch
      %32 = sbr.rel (0) target = $region13
    $region12: #{tpu_custom_call.1} parent=1 // pred_region
      _
    $region13: #{tpu_custom_call.1} parent=1 // pred_fallthru
      _
    // Predicated region
    $region14: #{tpu_custom_call.1} parent=1 // pred_check
      _
    $region15: #{tpu_custom_call.1} parent=1 // pred_check_branch
      %34 = sbr.rel (0) target = $region17
    $region16: #{tpu_custom_call.1} parent=1 // pred_region
      _
    $region17: #{tpu_custom_call.1} parent=1 // pred_fallthru
      _
    // Predicated region
    $region18: #{tpu_custom_call.1} parent=1 // pred_check
      _
    $region19: #{tpu_custom_call.1} parent=1 // pred_check_branch
      %36 = sbr.rel (0) target = $region21
    $region20: #{tpu_custom_call.1} parent=1 // pred_region
      _
    $region21: #{tpu_custom_call.1} parent=1 // pred_fallthru
      _
    // Predicated region
    $region22: #{tpu_custom_call.1} parent=1 // pred_check
      _
    $region23: #{tpu_custom_call.1} parent=1 // pred_check_branch
      %38 = sbr.rel (0) target = $region25
    $region24: #{tpu_custom_call.1} parent=1 // pred_region
      %40 = vsyncadd [#allocation8], 0
      %s41 = sshll.u32 %s5, 4
      %s42 = int_to_ptr.hbm [resolvable:$true] %s41
      %s43 = sshll.u32 [#allocation7], 4
      %s44 = int_to_ptr.vmem [resolvable:$true] %s43
      %49 = dma.hbm_to_vmem [thread:$0]  %s42, 4096, %s44, [#allocation8], 64, 64, 4
    $region25: #{tpu_custom_call.1} parent=1 // pred_fallthru
      _
    // Predicated region
    $region26: #{tpu_custom_call.1} parent=1 // pred_check
      _
    $region27: #{tpu_custom_call.1} parent=1 // pred_check_branch
      %51 = sbr.rel (0) target = $region29
    $region28: #{tpu_custom_call.1} parent=1 // pred_region
      %53 = vsyncadd [#allocation8], 0
      %s54 = sshll.u32 %s6, 4
      %s55 = int_to_ptr.hbm [resolvable:$true] %s54
      %s56 = sshll.u32 [#allocation9], 4
      %s57 = int_to_ptr.vmem [resolvable:$true] %s56
      %62 = dma.hbm_to_vmem [thread:$0]  %s55, 1024, %s57, [#allocation8], 512, 512, 32
    $region29: #{tpu_custom_call.1} parent=1 // pred_fallthru
      _
    // Predicated region
    $region30: #{tpu_custom_call.1} parent=1 // pred_check
      _
    $region31: #{tpu_custom_call.1} parent=1 // pred_check_branch
      %64 = sbr.rel (0) target = $region33
    $region32: #{tpu_custom_call.1} parent=1 // pred_region
      %66 = dma.done [#allocation5], 512
    $region33: #{tpu_custom_call.1} parent=1 // pred_fallthru
      _
    // Predicated region
    $region34: #{tpu_custom_call.1} parent=1 // pred_check
      _
    $region35: #{tpu_custom_call.1} parent=1 // pred_check_branch
      %68 = sbr.rel (0) target = $region37
    $region36: #{tpu_custom_call.1} parent=1 // pred_region
      %70 = dma.done [#allocation8], 4096
    $region37: #{tpu_custom_call.1} parent=1 // pred_fallthru
      _
    // Predicated region
    $region38: #{tpu_custom_call.1} parent=1 // pred_check
      _
    $region39: #{tpu_custom_call.1} parent=1 // pred_check_branch
      %72 = sbr.rel (0) target = $region41
    $region40: #{tpu_custom_call.1} parent=1 // pred_region
      %74 = dma.done [#allocation8], 1024
    $region41: #{tpu_custom_call.1} parent=1 // pred_fallthru
      _
    %v76 = vld [vmem:[#allocation4] sm:$0xff]
    %v77 = vld [vmem:[#allocation4 + $0x8] sm:$0xff]
    %v78 = vld [vmem:[#allocation4 + $0x10] sm:$0xff]
    %v79 = vld [vmem:[#allocation4 + $0x18] sm:$0xff]
    %v80 = vld [vmem:[#allocation9] ss:$8 sm:$0xf]
    %s81 = scalar_lea.vmem [#allocation9], 1
    %v82 = vld [vmem:[%s81] ss:$8 sm:$0xf]
    %s83 = scalar_lea.vmem [#allocation9], 2
    %v84 = vld [vmem:[%s83] ss:$8 sm:$0xf]
    %s85 = scalar_lea.vmem [#allocation9], 3
    %v86 = vld [vmem:[%s85] ss:$8 sm:$0xf]
    %s87 = scalar_lea.vmem [#allocation9], 5
    %v88 = vld [vmem:[%s87] ss:$8 sm:$0xf]
    %s89 = scalar_lea.vmem [#allocation9], 6
    %v90 = vld [vmem:[%s89] ss:$8 sm:$0xf]
    %s91 = scalar_lea.vmem [#allocation9], 7
    %v92 = vld [vmem:[%s91] ss:$8 sm:$0xf]
    %s93 = scalar_lea.vmem [#allocation9], 32
    %v94 = vld [vmem:[%s93] ss:$8 sm:$0xf]
    %95 = vrot.lane.b32.xlu0 %v76, 17
    %v96 = vpop.permute.xlu0 %95
    %97 = vrot.lane.b32.xlu0 %v77, 17
    %v98 = vpop.permute.xlu0 %97
    %99 = vrot.lane.b32.xlu0 %v78, 17
    %v100 = vpop.permute.xlu0 %99
    %101 = vrot.lane.b32.xlu0 %v79, 17
    %v102 = vpop.permute.xlu0 %101
    %v103 = vlaneseq
    %v104 = vand.u32 %v103, 127
    %vm105 = vcmp.lt.s32.totalorder %v104, 17
    %v106 = vsel %vm105, %v100, %v102
    %v107 = vsel %vm105, %v98, %v100
    %v108 = vsel %vm105, %v96, %v98
    %v109 = vsel %vm105, %v102, %v96
    %vm110 = vcmp.gt.f32.partialorder %v80, 0.5
    %v111 = vsel %vm110, 1, 0
    %v112 = vperm.slane %v111, 0
    %v113 = vperm.slane %v111, 1
    %v114 = vperm.slane %v111, 2
    %v115 = vperm.slane %v111, 3
    %vm116 = vcmp.eq.s32.totalorder %v112, 1
    %vm117 = vcmp.eq.s32.totalorder %v113, 1
    %vm118 = vcmp.eq.s32.totalorder %v114, 1
    %vm119 = vcmp.eq.s32.totalorder %v115, 1
    %v120 = vsel %vm116, %v109, 0.0
    %v121 = vsel %vm117, %v108, 0.0
    %v122 = vsel %vm118, %v107, 0.0
    %v123 = vsel %vm119, %v106, 0.0
    %v124 = vpack.c.bf16 %v121, %v120
    %v125 = vpack.c.bf16 %v123, %v122
    %126 = vst [vmem:[#allocation2] sm:$0xff] %v124
    %127 = vst [vmem:[#allocation2 + $0x8] sm:$0xff] %v125
    %128 = vrot.lane.b32.xlu0 %v76, 16
    %v129 = vpop.permute.xlu0 %128
    %130 = vrot.lane.b32.xlu0 %v77, 16
    %v131 = vpop.permute.xlu0 %130
    %132 = vrot.lane.b32.xlu0 %v78, 16
    %v133 = vpop.permute.xlu0 %132
    %134 = vrot.lane.b32.xlu0 %v79, 16
    %v135 = vpop.permute.xlu0 %134
    %vm136 = vcmp.lt.s32.totalorder %v104, 16
    %v137 = vsel %vm136, %v133, %v135
    %v138 = vsel %vm136, %v131, %v133
    %v139 = vsel %vm136, %v129, %v131
    %v140 = vsel %vm136, %v135, %v129
    %vm141 = vcmp.gt.f32.partialorder %v82, 0.5
    %v142 = vsel %vm141, 1, 0
    %v143 = vperm.slane %v142, 0
    %v144 = vperm.slane %v142, 1
    %v145 = vperm.slane %v142, 2
    %v146 = vperm.slane %v142, 3
    %vm147 = vcmp.eq.s32.totalorder %v143, 1
    %vm148 = vcmp.eq.s32.totalorder %v144, 1
    %vm149 = vcmp.eq.s32.totalorder %v145, 1
    %vm150 = vcmp.eq.s32.totalorder %v146, 1
    %v151 = vsel %vm147, %v140, 0.0
    %v152 = vsel %vm148, %v139, 0.0
    %v153 = vsel %vm149, %v138, 0.0
    %v154 = vsel %vm150, %v137, 0.0
    %v155 = vpack.c.bf16 %v152, %v151
    %v156 = vpack.c.bf16 %v154, %v153
    %157 = vst [vmem:[#allocation2 + $0x10] sm:$0xff] %v155
    %158 = vst [vmem:[#allocation2 + $0x18] sm:$0xff] %v156
    %159 = vrot.lane.b32.xlu0 %v76, 15
    %v160 = vpop.permute.xlu0 %159
    %161 = vrot.lane.b32.xlu0 %v77, 15
    %v162 = vpop.permute.xlu0 %161
    %163 = vrot.lane.b32.xlu0 %v78, 15
    %v164 = vpop.permute.xlu0 %163
    %165 = vrot.lane.b32.xlu0 %v79, 15
    %v166 = vpop.permute.xlu0 %165
    %vm167 = vcmp.lt.s32.totalorder %v104, 15
    %v168 = vsel %vm167, %v164, %v166
    %v169 = vsel %vm167, %v162, %v164
    %v170 = vsel %vm167, %v160, %v162
    %v171 = vsel %vm167, %v166, %v160
    %vm172 = vcmp.gt.f32.partialorder %v84, 0.5
    %v173 = vsel %vm172, 1, 0
    %v174 = vperm.slane %v173, 0
    %v175 = vperm.slane %v173, 1
    %v176 = vperm.slane %v173, 2
    %v177 = vperm.slane %v173, 3
    %vm178 = vcmp.eq.s32.totalorder %v174, 1
    %vm179 = vcmp.eq.s32.totalorder %v175, 1
    %vm180 = vcmp.eq.s32.totalorder %v176, 1
    %vm181 = vcmp.eq.s32.totalorder %v177, 1
    %v182 = vsel %vm178, %v171, 0.0
    %v183 = vsel %vm179, %v170, 0.0
    %v184 = vsel %vm180, %v169, 0.0
    %v185 = vsel %vm181, %v168, 0.0
    %v186 = vpack.c.bf16 %v183, %v182
    %v187 = vpack.c.bf16 %v185, %v184
    %188 = vst [vmem:[#allocation2 + $0x20] sm:$0xff] %v186
    %189 = vst [vmem:[#allocation2 + $0x28] sm:$0xff] %v187
    %190 = vrot.lane.b32.xlu0 %v76, 1
    %v191 = vpop.permute.xlu0 %190
    %192 = vrot.lane.b32.xlu0 %v77, 1
    %v193 = vpop.permute.xlu0 %192
    %194 = vrot.lane.b32.xlu0 %v78, 1
    %v195 = vpop.permute.xlu0 %194
    %196 = vrot.lane.b32.xlu0 %v79, 1
    %v197 = vpop.permute.xlu0 %196
    %vm198 = vcmp.lt.s32.totalorder %v104, 1
    %v199 = vsel %vm198, %v195, %v197
    %v200 = vsel %vm198, %v193, %v195
    %v201 = vsel %vm198, %v191, %v193
    %v202 = vsel %vm198, %v197, %v191
    %vm203 = vcmp.gt.f32.partialorder %v86, 0.5
    %v204 = vsel %vm203, 1, 0
    %v205 = vperm.slane %v204, 0
    %v206 = vperm.slane %v204, 1
    %v207 = vperm.slane %v204, 2
    %v208 = vperm.slane %v204, 3
    %vm209 = vcmp.eq.s32.totalorder %v205, 1
    %vm210 = vcmp.eq.s32.totalorder %v206, 1
    %vm211 = vcmp.eq.s32.totalorder %v207, 1
    %vm212 = vcmp.eq.s32.totalorder %v208, 1
    %v213 = vsel %vm209, %v202, 0.0
    %v214 = vsel %vm210, %v201, 0.0
    %v215 = vsel %vm211, %v200, 0.0
    %v216 = vsel %vm212, %v199, 0.0
    %v217 = vpack.c.bf16 %v214, %v213
    %v218 = vpack.c.bf16 %v216, %v215
    %219 = vst [vmem:[#allocation2 + $0x30] sm:$0xff] %v217
    %220 = vst [vmem:[#allocation2 + $0x38] sm:$0xff] %v218
    %v221 = vpack.c.bf16 %v77, %v76
    %v222 = vpack.c.bf16 %v79, %v78
    %223 = vst [vmem:[#allocation2 + $0x40] sm:$0xff] %v221
    %224 = vst [vmem:[#allocation2 + $0x48] sm:$0xff] %v222
    %225 = vrot.lane.b32.xlu0 %v76, 127
    %v226 = vpop.permute.xlu0 %225
    %227 = vrot.lane.b32.xlu0 %v77, 127
    %v228 = vpop.permute.xlu0 %227
    %229 = vrot.lane.b32.xlu0 %v78, 127
    %v230 = vpop.permute.xlu0 %229
    %231 = vrot.lane.b32.xlu0 %v79, 127
    %v232 = vpop.permute.xlu0 %231
    %vm233 = vcmp.lt.s32.totalorder %v104, 127
    %v234 = vsel %vm233, %v230, %v232
    %v235 = vsel %vm233, %v228, %v230
    %v236 = vsel %vm233, %v226, %v228
    %v237 = vsel %vm233, %v232, %v226
    %vm238 = vcmp.gt.f32.partialorder %v88, 0.5
    %v239 = vsel %vm238, 1, 0
    %v240 = vperm.slane %v239, 0
    %v241 = vperm.slane %v239, 1
    %v242 = vperm.slane %v239, 2
    %v243 = vperm.slane %v239, 3
    %vm244 = vcmp.eq.s32.totalorder %v240, 1
    %vm245 = vcmp.eq.s32.totalorder %v241, 1
    %vm246 = vcmp.eq.s32.totalorder %v242, 1
    %vm247 = vcmp.eq.s32.totalorder %v243, 1
    %v248 = vsel %vm244, %v236, 0.0
    %v249 = vsel %vm245, %v235, 0.0
    %v250 = vsel %vm246, %v234, 0.0
    %v251 = vsel %vm247, %v237, 0.0
    %v252 = vpack.c.bf16 %v249, %v248
    %v253 = vpack.c.bf16 %v251, %v250
    %254 = vst [vmem:[#allocation2 + $0x50] sm:$0xff] %v252
    %255 = vst [vmem:[#allocation2 + $0x58] sm:$0xff] %v253
    %256 = vrot.lane.b32.xlu0 %v76, 113
    %v257 = vpop.permute.xlu0 %256
    %258 = vrot.lane.b32.xlu0 %v77, 113
    %v259 = vpop.permute.xlu0 %258
    %260 = vrot.lane.b32.xlu0 %v78, 113
    %v261 = vpop.permute.xlu0 %260
    %262 = vrot.lane.b32.xlu0 %v79, 113
    %v263 = vpop.permute.xlu0 %262
    %vm264 = vcmp.lt.s32.totalorder %v104, 113
    %v265 = vsel %vm264, %v261, %v263
    %v266 = vsel %vm264, %v259, %v261
    %v267 = vsel %vm264, %v257, %v259
    %v268 = vsel %vm264, %v263, %v257
    %vm269 = vcmp.gt.f32.partialorder %v90, 0.5
    %v270 = vsel %vm269, 1, 0
    %v271 = vperm.slane %v270, 0
    %v272 = vperm.slane %v270, 1
    %v273 = vperm.slane %v270, 2
    %v274 = vperm.slane %v270, 3
    %vm275 = vcmp.eq.s32.totalorder %v271, 1
    %vm276 = vcmp.eq.s32.totalorder %v272, 1
    %vm277 = vcmp.eq.s32.totalorder %v273, 1
    %vm278 = vcmp.eq.s32.totalorder %v274, 1
    %v279 = vsel %vm275, %v267, 0.0
    %v280 = vsel %vm276, %v266, 0.0
    %v281 = vsel %vm277, %v265, 0.0
    %v282 = vsel %vm278, %v268, 0.0
    %v283 = vpack.c.bf16 %v280, %v279
    %v284 = vpack.c.bf16 %v282, %v281
    %285 = vst [vmem:[#allocation2 + $0x60] sm:$0xff] %v283
    %286 = vst [vmem:[#allocation2 + $0x68] sm:$0xff] %v284
    %287 = vrot.lane.b32.xlu0 %v76, 112
    %v288 = vpop.permute.xlu0 %287
    %289 = vrot.lane.b32.xlu0 %v77, 112
    %v290 = vpop.permute.xlu0 %289
    %291 = vrot.lane.b32.xlu0 %v78, 112
    %v292 = vpop.permute.xlu0 %291
    %293 = vrot.lane.b32.xlu0 %v79, 112
    %v294 = vpop.permute.xlu0 %293
    %vm295 = vcmp.lt.s32.totalorder %v104, 112
    %v296 = vsel %vm295, %v292, %v294
    %v297 = vsel %vm295, %v290, %v292
    %v298 = vsel %vm295, %v288, %v290
    %v299 = vsel %vm295, %v294, %v288
    %vm300 = vcmp.gt.f32.partialorder %v92, 0.5
    %v301 = vsel %vm300, 1, 0
    %v302 = vperm.slane %v301, 0
    %v303 = vperm.slane %v301, 1
    %v304 = vperm.slane %v301, 2
    %v305 = vperm.slane %v301, 3
    %vm306 = vcmp.eq.s32.totalorder %v302, 1
    %vm307 = vcmp.eq.s32.totalorder %v303, 1
    %vm308 = vcmp.eq.s32.totalorder %v304, 1
    %vm309 = vcmp.eq.s32.totalorder %v305, 1
    %v310 = vsel %vm306, %v298, 0.0
    %v311 = vsel %vm307, %v297, 0.0
    %v312 = vsel %vm308, %v296, 0.0
    %v313 = vsel %vm309, %v299, 0.0
    %v314 = vpack.c.bf16 %v311, %v310
    %v315 = vpack.c.bf16 %v313, %v312
    %316 = vst [vmem:[#allocation2 + $0x70] sm:$0xff] %v314
    %317 = vst [vmem:[#allocation2 + $0x78] sm:$0xff] %v315
    %318 = vrot.lane.b32.xlu0 %v76, 111
    %v319 = vpop.permute.xlu0 %318
    %320 = vrot.lane.b32.xlu0 %v77, 111
    %v321 = vpop.permute.xlu0 %320
    %322 = vrot.lane.b32.xlu0 %v78, 111
    %v323 = vpop.permute.xlu0 %322
    %324 = vrot.lane.b32.xlu0 %v79, 111
    %v325 = vpop.permute.xlu0 %324
    %vm326 = vcmp.lt.s32.totalorder %v104, 111
    %v327 = vsel %vm326, %v323, %v325
    %v328 = vsel %vm326, %v321, %v323
    %v329 = vsel %vm326, %v319, %v321
    %v330 = vsel %vm326, %v325, %v319
    %vm331 = vcmp.gt.f32.partialorder %v94, 0.5
    %v332 = vsel %vm331, 1, 0
    %v333 = vperm.slane %v332, 0
    %v334 = vperm.slane %v332, 1
    %v335 = vperm.slane %v332, 2
    %v336 = vperm.slane %v332, 3
    %vm337 = vcmp.eq.s32.totalorder %v333, 1
    %vm338 = vcmp.eq.s32.totalorder %v334, 1
    %vm339 = vcmp.eq.s32.totalorder %v335, 1
    %vm340 = vcmp.eq.s32.totalorder %v336, 1
    %v341 = vsel %vm337, %v329, 0.0
    %v342 = vsel %vm338, %v328, 0.0
    %v343 = vsel %vm339, %v327, 0.0
    %v344 = vsel %vm340, %v330, 0.0
    %v345 = vpack.c.bf16 %v342, %v341
    %v346 = vpack.c.bf16 %v344, %v343
    %347 = vst [vmem:[#allocation2 + $0x80] sm:$0xff] %v345
    %348 = vst [vmem:[#allocation2 + $0x88] sm:$0xff] %v346
    %v349 = vld [vmem:[%s1] sm:$0xf]
    %v350 = vld [vmem:[#allocation2] sm:$0xff]
    %v351 = vld [vmem:[#allocation2 + $0x8] sm:$0xff]
    %v352 = vld [vmem:[#allocation2 + $0x10] sm:$0xff]
    %v353 = vld [vmem:[#allocation2 + $0x18] sm:$0xff]
    %v354 = vld [vmem:[#allocation2 + $0x20] sm:$0xff]
    %v355 = vld [vmem:[#allocation2 + $0x28] sm:$0xff]
    %v356 = vld [vmem:[#allocation2 + $0x30] sm:$0xff]
    %v357 = vld [vmem:[#allocation2 + $0x38] sm:$0xff]
    %v358 = vld [vmem:[#allocation2 + $0x40] sm:$0xff]
    %v359 = vld [vmem:[#allocation2 + $0x48] sm:$0xff]
    %v360 = vld [vmem:[#allocation2 + $0x50] sm:$0xff]
    %v361 = vld [vmem:[#allocation2 + $0x58] sm:$0xff]
    %v362 = vld [vmem:[#allocation2 + $0x60] sm:$0xff]
    %v363 = vld [vmem:[#allocation2 + $0x68] sm:$0xff]
    %v364 = vld [vmem:[#allocation2 + $0x70] sm:$0xff]
    %v365 = vld [vmem:[#allocation2 + $0x78] sm:$0xff]
    %v366 = vld [vmem:[#allocation2 + $0x80] sm:$0xff]
    %v367 = vld [vmem:[#allocation2 + $0x88] sm:$0xff]
    %v368 = vld [vmem:[%s2] sm:$0xff]
    %370 = vset.pattern.permute.xlu0 0
    %371 = vperm.xlu0 %370, %v368
    %v372 = vpop.permute.xlu0 %371
    %v392 = vunpack.c.l.b16 %v350
    %v393 = vunpack.c.h.b16 %v350
    %v394 = vunpack.c.l.b16 %v351
    %v395 = vunpack.c.h.b16 %v351
    %v396 = vunpack.c.l.b16 %v352
    %v397 = vunpack.c.h.b16 %v352
    %v398 = vunpack.c.l.b16 %v353
    %v399 = vunpack.c.h.b16 %v353
    %v400 = vunpack.c.l.b16 %v354
    %v401 = vunpack.c.h.b16 %v354
    %v402 = vunpack.c.l.b16 %v355
    %v403 = vunpack.c.h.b16 %v355
    %v404 = vunpack.c.l.b16 %v356
    %v405 = vunpack.c.h.b16 %v356
    %v406 = vunpack.c.l.b16 %v357
    %v407 = vunpack.c.h.b16 %v357
    %v408 = vunpack.c.l.b16 %v358
    %v409 = vunpack.c.h.b16 %v358
    %v410 = vunpack.c.l.b16 %v359
    %v411 = vunpack.c.h.b16 %v359
    %v412 = vunpack.c.l.b16 %v360
    %v413 = vunpack.c.h.b16 %v360
    %v414 = vunpack.c.l.b16 %v361
    %v415 = vunpack.c.h.b16 %v361
    %v416 = vunpack.c.l.b16 %v362
    %v417 = vunpack.c.h.b16 %v362
    %v418 = vunpack.c.l.b16 %v363
    %v419 = vunpack.c.h.b16 %v363
    %v420 = vunpack.c.l.b16 %v364
    %v421 = vunpack.c.h.b16 %v364
    %v422 = vunpack.c.l.b16 %v365
    %v423 = vunpack.c.h.b16 %v365
    %v424 = vunpack.c.l.b16 %v366
    %v425 = vunpack.c.h.b16 %v366
    %v426 = vunpack.c.l.b16 %v367
    %v427 = vunpack.c.h.b16 %v367
    %v428 = vpack.c.b16 %v396, %v392
    %v429 = vpack.c.b16 %v397, %v393
    %v430 = vpack.c.b16 %v398, %v394
    %v431 = vpack.c.b16 %v399, %v395
    %v432 = vpack.c.b16 %v404, %v400
    %v433 = vpack.c.b16 %v405, %v401
    %v434 = vpack.c.b16 %v406, %v402
    %v435 = vpack.c.b16 %v407, %v403
    %v436 = vpack.c.b16 %v412, %v408
    %v437 = vpack.c.b16 %v413, %v409
    %v438 = vpack.c.b16 %v414, %v410
    %v439 = vpack.c.b16 %v415, %v411
    %v440 = vpack.c.b16 %v420, %v416
    %v441 = vpack.c.b16 %v421, %v417
    %v442 = vpack.c.b16 %v422, %v418
    %v443 = vpack.c.b16 %v423, %v419
    %v444 = vpack.c.b16 %v424, %v424
    %v445 = vpack.c.b16 %v425, %v425
    %v446 = vpack.c.b16 %v426, %v426
    %v447 = vpack.c.b16 %v427, %v427
    %vm464 = vcmask 588800
    %v466 = vsel %vm464, %v349, 0
    %vm468 = vcmask 1043456
    %v470 = vsel %vm468, %v444, 0
    %v473 = vsel %vm468, %v445, 0
    %v476 = vsel %vm468, %v446, 0
    %v479 = vsel %vm468, %v447, 0
    %481 = vmatpush.bf16.msra.mxu0 0
    %482 = vmatpush.bf16.msra.mxu0 0
    %483 = vmatpush.bf16.msra.mxu0 0
    %484 = vmatpush.bf16.msra.mxu0 %v470
    %485 = vmatpush.bf16.msra.mxu0 %v440
    %486 = vmatpush.bf16.msra.mxu0 %v436
    %487 = vmatpush.bf16.msra.mxu0 %v432
    %488 = vmatpush.bf16.msra.mxu0 %v428
    %489 = vmatmul.bf16.gmra.mxu0 %v466
    %v490 = vpop.f32.mrf.mxu0
    %v491 = vadd.f32 %v372, %v490
    %v492 = vpop.f32.mrf.mxu0
    %493 = vdwg.mxu0
    %494 = vmatpush.bf16.msra.mxu0 0
    %495 = vmatpush.bf16.msra.mxu0 0
    %496 = vmatpush.bf16.msra.mxu0 0
    %497 = vmatpush.bf16.msra.mxu0 %v473
    %498 = vmatpush.bf16.msra.mxu0 %v441
    %499 = vmatpush.bf16.msra.mxu0 %v437
    %500 = vmatpush.bf16.msra.mxu0 %v433
    %501 = vmatpush.bf16.msra.mxu0 %v429
    %502 = vmatmul.bf16.gmra.mxu0 %v466
    %v503 = vpop.f32.mrf.mxu0
    %v504 = vadd.f32 %v372, %v503
    %v505 = vpop.f32.mrf.mxu0
    %506 = vdwg.mxu0
    %507 = vmatpush.bf16.msra.mxu0 0
    %508 = vmatpush.bf16.msra.mxu0 0
    %509 = vmatpush.bf16.msra.mxu0 0
    %510 = vmatpush.bf16.msra.mxu0 %v476
    %511 = vmatpush.bf16.msra.mxu0 %v442
    %512 = vmatpush.bf16.msra.mxu0 %v438
    %513 = vmatpush.bf16.msra.mxu0 %v434
    %514 = vmatpush.bf16.msra.mxu0 %v430
    %515 = vmatmul.bf16.gmra.mxu0 %v466
    %v516 = vpop.f32.mrf.mxu0
    %v517 = vadd.f32 %v372, %v516
    %v518 = vpop.f32.mrf.mxu0
    %519 = vdwg.mxu0
    %520 = vmatpush.bf16.msra.mxu0 0
    %521 = vmatpush.bf16.msra.mxu0 0
    %522 = vmatpush.bf16.msra.mxu0 0
    %523 = vmatpush.bf16.msra.mxu0 %v479
    %524 = vmatpush.bf16.msra.mxu0 %v443
    %525 = vmatpush.bf16.msra.mxu0 %v439
    %526 = vmatpush.bf16.msra.mxu0 %v435
    %527 = vmatpush.bf16.msra.mxu0 %v431
    %528 = vmatmul.bf16.gmra.mxu0 %v466
    %v529 = vpop.f32.mrf.mxu0
    %v530 = vadd.f32 %v372, %v529
    %v531 = vpop.f32.mrf.mxu0
    %532 = vdwg.mxu0
    %v533 = vmax.f32 %v491, 0.0
    %v534 = vmax.f32 %v504, 0.0
    %v535 = vmax.f32 %v517, 0.0
    %v536 = vmax.f32 %v530, 0.0
    %537 = vrot.lane.b32.xlu0 %v533, 17
    %v538 = vpop.permute.xlu0 %537
    %539 = vrot.lane.b32.xlu0 %v534, 17
    %v540 = vpop.permute.xlu0 %539
    %541 = vrot.lane.b32.xlu0 %v535, 17
    %v542 = vpop.permute.xlu0 %541
    %543 = vrot.lane.b32.xlu0 %v536, 17
    %v544 = vpop.permute.xlu0 %543
    %v545 = vsel %vm105, %v542, %v544
    %v546 = vsel %vm105, %v540, %v542
    %v547 = vsel %vm105, %v538, %v540
    %v548 = vsel %vm105, %v544, %v538
    %v549 = vsel %vm116, %v548, 0.0
    %v550 = vsel %vm117, %v547, 0.0
    %v551 = vsel %vm118, %v546, 0.0
    %v552 = vsel %vm119, %v545, 0.0
    %v553 = vpack.c.bf16 %v550, %v549
    %v554 = vpack.c.bf16 %v552, %v551
    %555 = vst [vmem:[#allocation3] sm:$0xff] %v553
    %556 = vst [vmem:[#allocation3 + $0x8] sm:$0xff] %v554
    %557 = vrot.lane.b32.xlu0 %v533, 16
    %v558 = vpop.permute.xlu0 %557
    %559 = vrot.lane.b32.xlu0 %v534, 16
    %v560 = vpop.permute.xlu0 %559
    %561 = vrot.lane.b32.xlu0 %v535, 16
    %v562 = vpop.permute.xlu0 %561
    %563 = vrot.lane.b32.xlu0 %v536, 16
    %v564 = vpop.permute.xlu0 %563
    %v565 = vsel %vm136, %v562, %v564
    %v566 = vsel %vm136, %v560, %v562
    %v567 = vsel %vm136, %v558, %v560
    %v568 = vsel %vm136, %v564, %v558
    %v569 = vsel %vm147, %v568, 0.0
    %v570 = vsel %vm148, %v567, 0.0
    %v571 = vsel %vm149, %v566, 0.0
    %v572 = vsel %vm150, %v565, 0.0
    %v573 = vpack.c.bf16 %v570, %v569
    %v574 = vpack.c.bf16 %v572, %v571
    %575 = vst [vmem:[#allocation3 + $0x10] sm:$0xff] %v573
    %576 = vst [vmem:[#allocation3 + $0x18] sm:$0xff] %v574
    %577 = vrot.lane.b32.xlu0 %v533, 15
    %v578 = vpop.permute.xlu0 %577
    %579 = vrot.lane.b32.xlu0 %v534, 15
    %v580 = vpop.permute.xlu0 %579
    %581 = vrot.lane.b32.xlu0 %v535, 15
    %v582 = vpop.permute.xlu0 %581
    %583 = vrot.lane.b32.xlu0 %v536, 15
    %v584 = vpop.permute.xlu0 %583
    %v585 = vsel %vm167, %v582, %v584
    %v586 = vsel %vm167, %v580, %v582
    %v587 = vsel %vm167, %v578, %v580
    %v588 = vsel %vm167, %v584, %v578
    %v589 = vsel %vm178, %v588, 0.0
    %v590 = vsel %vm179, %v587, 0.0
    %v591 = vsel %vm180, %v586, 0.0
    %v592 = vsel %vm181, %v585, 0.0
    %v593 = vpack.c.bf16 %v590, %v589
    %v594 = vpack.c.bf16 %v592, %v591
    %595 = vst [vmem:[#allocation3 + $0x20] sm:$0xff] %v593
    %596 = vst [vmem:[#allocation3 + $0x28] sm:$0xff] %v594
    %597 = vrot.lane.b32.xlu0 %v533, 1
    %v598 = vpop.permute.xlu0 %597
    %599 = vrot.lane.b32.xlu0 %v534, 1
    %v600 = vpop.permute.xlu0 %599
    %601 = vrot.lane.b32.xlu0 %v535, 1
    %v602 = vpop.permute.xlu0 %601
    %603 = vrot.lane.b32.xlu0 %v536, 1
    %v604 = vpop.permute.xlu0 %603
    %v605 = vsel %vm198, %v602, %v604
    %v606 = vsel %vm198, %v600, %v602
    %v607 = vsel %vm198, %v598, %v600
    %v608 = vsel %vm198, %v604, %v598
    %v609 = vsel %vm209, %v608, 0.0
    %v610 = vsel %vm210, %v607, 0.0
    %v611 = vsel %vm211, %v606, 0.0
    %v612 = vsel %vm212, %v605, 0.0
    %v613 = vpack.c.bf16 %v610, %v609
    %v614 = vpack.c.bf16 %v612, %v611
    %615 = vst [vmem:[#allocation3 + $0x30] sm:$0xff] %v613
    %616 = vst [vmem:[#allocation3 + $0x38] sm:$0xff] %v614
    %v617 = vpack.c.bf16 %v534, %v533
    %v618 = vpack.c.bf16 %v536, %v535
    %619 = vst [vmem:[#allocation3 + $0x40] sm:$0xff] %v617
    %620 = vst [vmem:[#allocation3 + $0x48] sm:$0xff] %v618
    %621 = vrot.lane.b32.xlu0 %v533, 127
    %v622 = vpop.permute.xlu0 %621
    %623 = vrot.lane.b32.xlu0 %v534, 127
    %v624 = vpop.permute.xlu0 %623
    %625 = vrot.lane.b32.xlu0 %v535, 127
    %v626 = vpop.permute.xlu0 %625
    %627 = vrot.lane.b32.xlu0 %v536, 127
    %v628 = vpop.permute.xlu0 %627
    %v629 = vsel %vm233, %v626, %v628
    %v630 = vsel %vm233, %v624, %v626
    %v631 = vsel %vm233, %v622, %v624
    %v632 = vsel %vm233, %v628, %v622
    %v633 = vsel %vm244, %v631, 0.0
    %v634 = vsel %vm245, %v630, 0.0
    %v635 = vsel %vm246, %v629, 0.0
    %v636 = vsel %vm247, %v632, 0.0
    %v637 = vpack.c.bf16 %v634, %v633
    %v638 = vpack.c.bf16 %v636, %v635
    %639 = vst [vmem:[#allocation3 + $0x50] sm:$0xff] %v637
    %640 = vst [vmem:[#allocation3 + $0x58] sm:$0xff] %v638
    %641 = vrot.lane.b32.xlu0 %v533, 113
    %v642 = vpop.permute.xlu0 %641
    %643 = vrot.lane.b32.xlu0 %v534, 113
    %v644 = vpop.permute.xlu0 %643
    %645 = vrot.lane.b32.xlu0 %v535, 113
    %v646 = vpop.permute.xlu0 %645
    %647 = vrot.lane.b32.xlu0 %v536, 113
    %v648 = vpop.permute.xlu0 %647
    %v649 = vsel %vm264, %v646, %v648
    %v650 = vsel %vm264, %v644, %v646
    %v651 = vsel %vm264, %v642, %v644
    %v652 = vsel %vm264, %v648, %v642
    %v653 = vsel %vm275, %v651, 0.0
    %v654 = vsel %vm276, %v650, 0.0
    %v655 = vsel %vm277, %v649, 0.0
    %v656 = vsel %vm278, %v652, 0.0
    %v657 = vpack.c.bf16 %v654, %v653
    %v658 = vpack.c.bf16 %v656, %v655
    %659 = vst [vmem:[#allocation3 + $0x60] sm:$0xff] %v657
    %660 = vst [vmem:[#allocation3 + $0x68] sm:$0xff] %v658
    %661 = vrot.lane.b32.xlu0 %v533, 112
    %v662 = vpop.permute.xlu0 %661
    %663 = vrot.lane.b32.xlu0 %v534, 112
    %v664 = vpop.permute.xlu0 %663
    %665 = vrot.lane.b32.xlu0 %v535, 112
    %v666 = vpop.permute.xlu0 %665
    %667 = vrot.lane.b32.xlu0 %v536, 112
    %v668 = vpop.permute.xlu0 %667
    %v669 = vsel %vm295, %v666, %v668
    %v670 = vsel %vm295, %v664, %v666
    %v671 = vsel %vm295, %v662, %v664
    %v672 = vsel %vm295, %v668, %v662
    %v673 = vsel %vm306, %v671, 0.0
    %v674 = vsel %vm307, %v670, 0.0
    %v675 = vsel %vm308, %v669, 0.0
    %v676 = vsel %vm309, %v672, 0.0
    %v677 = vpack.c.bf16 %v674, %v673
    %v678 = vpack.c.bf16 %v676, %v675
    %679 = vst [vmem:[#allocation3 + $0x70] sm:$0xff] %v677
    %680 = vst [vmem:[#allocation3 + $0x78] sm:$0xff] %v678
    %681 = vrot.lane.b32.xlu0 %v533, 111
    %v682 = vpop.permute.xlu0 %681
    %683 = vrot.lane.b32.xlu0 %v534, 111
    %v684 = vpop.permute.xlu0 %683
    %685 = vrot.lane.b32.xlu0 %v535, 111
    %v686 = vpop.permute.xlu0 %685
    %687 = vrot.lane.b32.xlu0 %v536, 111
    %v688 = vpop.permute.xlu0 %687
    %v689 = vsel %vm326, %v686, %v688
    %v690 = vsel %vm326, %v684, %v686
    %v691 = vsel %vm326, %v682, %v684
    %v692 = vsel %vm326, %v688, %v682
    %v693 = vsel %vm337, %v691, 0.0
    %v694 = vsel %vm338, %v690, 0.0
    %v695 = vsel %vm339, %v689, 0.0
    %v696 = vsel %vm340, %v692, 0.0
    %v697 = vpack.c.bf16 %v694, %v693
    %v698 = vpack.c.bf16 %v696, %v695
    %699 = vst [vmem:[#allocation3 + $0x80] sm:$0xff] %v697
    %700 = vst [vmem:[#allocation3 + $0x88] sm:$0xff] %v698
    %v701 = vld [vmem:[%s3] sm:$0xf]
    %v702 = vld [vmem:[#allocation3] sm:$0xff]
    %v703 = vld [vmem:[#allocation3 + $0x8] sm:$0xff]
    %v704 = vld [vmem:[#allocation3 + $0x10] sm:$0xff]
    %v705 = vld [vmem:[#allocation3 + $0x18] sm:$0xff]
    %v706 = vld [vmem:[#allocation3 + $0x20] sm:$0xff]
    %v707 = vld [vmem:[#allocation3 + $0x28] sm:$0xff]
    %v708 = vld [vmem:[#allocation3 + $0x30] sm:$0xff]
    %v709 = vld [vmem:[#allocation3 + $0x38] sm:$0xff]
    %v710 = vld [vmem:[#allocation3 + $0x40] sm:$0xff]
    %v711 = vld [vmem:[#allocation3 + $0x48] sm:$0xff]
    %v712 = vld [vmem:[#allocation3 + $0x50] sm:$0xff]
    %v713 = vld [vmem:[#allocation3 + $0x58] sm:$0xff]
    %v714 = vld [vmem:[#allocation3 + $0x60] sm:$0xff]
    %v715 = vld [vmem:[#allocation3 + $0x68] sm:$0xff]
    %v716 = vld [vmem:[#allocation3 + $0x70] sm:$0xff]
    %v717 = vld [vmem:[#allocation3 + $0x78] sm:$0xff]
    %v718 = vld [vmem:[#allocation3 + $0x80] sm:$0xff]
    %v719 = vld [vmem:[#allocation3 + $0x88] sm:$0xff]
    %v720 = vld [vmem:[%s4] sm:$0xff]
    %722 = vset.pattern.permute.xlu0 0
    %723 = vperm.xlu0 %722, %v720
    %v724 = vpop.permute.xlu0 %723
    %v744 = vunpack.c.l.b16 %v702
    %v745 = vunpack.c.h.b16 %v702
    %v746 = vunpack.c.l.b16 %v703
    %v747 = vunpack.c.h.b16 %v703
    %v748 = vunpack.c.l.b16 %v704
    %v749 = vunpack.c.h.b16 %v704
    %v750 = vunpack.c.l.b16 %v705
    %v751 = vunpack.c.h.b16 %v705
    %v752 = vunpack.c.l.b16 %v706
    %v753 = vunpack.c.h.b16 %v706
    %v754 = vunpack.c.l.b16 %v707
    %v755 = vunpack.c.h.b16 %v707
    %v756 = vunpack.c.l.b16 %v708
    %v757 = vunpack.c.h.b16 %v708
    %v758 = vunpack.c.l.b16 %v709
    %v759 = vunpack.c.h.b16 %v709
    %v760 = vunpack.c.l.b16 %v710
    %v761 = vunpack.c.h.b16 %v710
    %v762 = vunpack.c.l.b16 %v711
    %v763 = vunpack.c.h.b16 %v711
    %v764 = vunpack.c.l.b16 %v712
    %v765 = vunpack.c.h.b16 %v712
    %v766 = vunpack.c.l.b16 %v713
    %v767 = vunpack.c.h.b16 %v713
    %v768 = vunpack.c.l.b16 %v714
    %v769 = vunpack.c.h.b16 %v714
    %v770 = vunpack.c.l.b16 %v715
    %v771 = vunpack.c.h.b16 %v715
    %v772 = vunpack.c.l.b16 %v716
    %v773 = vunpack.c.h.b16 %v716
    %v774 = vunpack.c.l.b16 %v717
    %v775 = vunpack.c.h.b16 %v717
    %v776 = vunpack.c.l.b16 %v718
    %v777 = vunpack.c.h.b16 %v718
    %v778 = vunpack.c.l.b16 %v719
    %v779 = vunpack.c.h.b16 %v719
    %v780 = vpack.c.b16 %v748, %v744
    %v781 = vpack.c.b16 %v749, %v745
    %v782 = vpack.c.b16 %v750, %v746
    %v783 = vpack.c.b16 %v751, %v747
    %v784 = vpack.c.b16 %v756, %v752
    %v785 = vpack.c.b16 %v757, %v753
    %v786 = vpack.c.b16 %v758, %v754
    %v787 = vpack.c.b16 %v759, %v755
    %v788 = vpack.c.b16 %v764, %v760
    %v789 = vpack.c.b16 %v765, %v761
    %v790 = vpack.c.b16 %v766, %v762
    %v791 = vpack.c.b16 %v767, %v763
    %v792 = vpack.c.b16 %v772, %v768
    %v793 = vpack.c.b16 %v773, %v769
    %v794 = vpack.c.b16 %v774, %v770
    %v795 = vpack.c.b16 %v775, %v771
    %v796 = vpack.c.b16 %v776, %v776
    %v797 = vpack.c.b16 %v777, %v777
    %v798 = vpack.c.b16 %v778, %v778
    %v799 = vpack.c.b16 %v779, %v779
    %v817 = vsel %vm464, %v701, 0
    %v820 = vsel %vm468, %v796, 0
    %v823 = vsel %vm468, %v797, 0
    %v826 = vsel %vm468, %v798, 0
    %v829 = vsel %vm468, %v799, 0
    %831 = vmatpush.bf16.msra.mxu0 0
    %832 = vmatpush.bf16.msra.mxu0 0
    %833 = vmatpush.bf16.msra.mxu0 0
    %834 = vmatpush.bf16.msra.mxu0 %v820
    %835 = vmatpush.bf16.msra.mxu0 %v792
    %836 = vmatpush.bf16.msra.mxu0 %v788
    %837 = vmatpush.bf16.msra.mxu0 %v784
    %838 = vmatpush.bf16.msra.mxu0 %v780
    %839 = vmatmul.bf16.gmra.mxu0 %v817
    %v840 = vpop.f32.mrf.mxu0
    %v841 = vadd.f32 %v724, %v840
    %v842 = vpop.f32.mrf.mxu0
    %843 = vdwg.mxu0
    %844 = vmatpush.bf16.msra.mxu0 0
    %845 = vmatpush.bf16.msra.mxu0 0
    %846 = vmatpush.bf16.msra.mxu0 0
    %847 = vmatpush.bf16.msra.mxu0 %v823
    %848 = vmatpush.bf16.msra.mxu0 %v793
    %849 = vmatpush.bf16.msra.mxu0 %v789
    %850 = vmatpush.bf16.msra.mxu0 %v785
    %851 = vmatpush.bf16.msra.mxu0 %v781
    %852 = vmatmul.bf16.gmra.mxu0 %v817
    %v853 = vpop.f32.mrf.mxu0
    %v854 = vadd.f32 %v724, %v853
    %v855 = vpop.f32.mrf.mxu0
    %856 = vdwg.mxu0
    %857 = vmatpush.bf16.msra.mxu0 0
    %858 = vmatpush.bf16.msra.mxu0 0
    %859 = vmatpush.bf16.msra.mxu0 0
    %860 = vmatpush.bf16.msra.mxu0 %v826
    %861 = vmatpush.bf16.msra.mxu0 %v794
    %862 = vmatpush.bf16.msra.mxu0 %v790
    %863 = vmatpush.bf16.msra.mxu0 %v786
    %864 = vmatpush.bf16.msra.mxu0 %v782
    %865 = vmatmul.bf16.gmra.mxu0 %v817
    %v866 = vpop.f32.mrf.mxu0
    %v867 = vadd.f32 %v724, %v866
    %v868 = vpop.f32.mrf.mxu0
    %869 = vdwg.mxu0
    %870 = vmatpush.bf16.msra.mxu0 0
    %871 = vmatpush.bf16.msra.mxu0 0
    %872 = vmatpush.bf16.msra.mxu0 0
    %873 = vmatpush.bf16.msra.mxu0 %v829
    %874 = vmatpush.bf16.msra.mxu0 %v795
    %875 = vmatpush.bf16.msra.mxu0 %v791
    %876 = vmatpush.bf16.msra.mxu0 %v787
    %877 = vmatpush.bf16.msra.mxu0 %v783
    %878 = vmatmul.bf16.gmra.mxu0 %v817
    %v879 = vpop.f32.mrf.mxu0
    %v880 = vadd.f32 %v724, %v879
    %v881 = vpop.f32.mrf.mxu0
    %882 = vdwg.mxu0
    %v883 = vmax.f32 %v841, 0.0
    %v884 = vmax.f32 %v854, 0.0
    %v885 = vmax.f32 %v867, 0.0
    %v886 = vmax.f32 %v880, 0.0
    %887 = vst [vmem:[#allocation11] sm:$0xff] %v883
    %888 = vst [vmem:[#allocation11 + $0x8] sm:$0xff] %v884
    %s889 = scalar_lea.vmem [#allocation11], 16
    %890 = vst [vmem:[%s889] sm:$0xff] %v885
    %891 = vst [vmem:[%s889 + $0x8] sm:$0xff] %v886
    %892 = vrot.lane.b32.xlu0 %v883, 127
    %v893 = vpop.permute.xlu0 %892
    %894 = vrot.lane.b32.xlu0 %v884, 127
    %v895 = vpop.permute.xlu0 %894
    %896 = vrot.lane.b32.xlu0 %v885, 127
    %v897 = vpop.permute.xlu0 %896
    %898 = vrot.lane.b32.xlu0 %v886, 127
    %v899 = vpop.permute.xlu0 %898
    %v900 = vsel %vm233, %v897, %v899
    %v901 = vsel %vm233, %v895, %v897
    %v902 = vsel %vm233, %v893, %v895
    %v903 = vsel %vm233, %v899, %v893
    %v904 = vmax.f32 %v883, %v902
    %v905 = vmax.f32 %v884, %v901
    %v906 = vmax.f32 %v885, %v900
    %v907 = vmax.f32 %v886, %v903
    %908 = vrot.lane.b32.xlu0 %v904, 112
    %v909 = vpop.permute.xlu0 %908
    %910 = vrot.lane.b32.xlu0 %v905, 112
    %v911 = vpop.permute.xlu0 %910
    %912 = vrot.lane.b32.xlu0 %v906, 112
    %v913 = vpop.permute.xlu0 %912
    %914 = vrot.lane.b32.xlu0 %v907, 112
    %v915 = vpop.permute.xlu0 %914
    %v916 = vsel %vm295, %v913, %v915
    %v917 = vsel %vm295, %v911, %v913
    %v918 = vsel %vm295, %v909, %v911
    %v919 = vsel %vm295, %v915, %v909
    %v920 = vmax.f32 %v904, %v918
    %v921 = vmax.f32 %v905, %v917
    %v922 = vmax.f32 %v906, %v916
    %v923 = vmax.f32 %v907, %v919
    %v924 = vld [vmem:[#allocation7] sm:$0xf]
    %v925 = vld [vmem:[#allocation7 + $0x4] sm:$0xf]
    %v926 = vld [vmem:[#allocation7 + $0x8] sm:$0xf]
    %v927 = vld [vmem:[#allocation7 + $0xc] sm:$0xf]
    %v928 = vld [vmem:[#allocation7 + $0x10] sm:$0xf]
    %v929 = vld [vmem:[#allocation7 + $0x14] sm:$0xf]
    %v930 = vld [vmem:[#allocation7 + $0x18] sm:$0xf]
    %v931 = vld [vmem:[#allocation7 + $0x1c] sm:$0xf]
    %v932 = vld [vmem:[#allocation7 + $0x20] sm:$0xf]
    %v933 = vld [vmem:[#allocation7 + $0x24] sm:$0xf]
    %v934 = vld [vmem:[#allocation7 + $0x28] sm:$0xf]
    %v935 = vld [vmem:[#allocation7 + $0x2c] sm:$0xf]
    %v936 = vld [vmem:[#allocation7 + $0x30] sm:$0xf]
    %v937 = vld [vmem:[#allocation7 + $0x34] sm:$0xf]
    %v938 = vld [vmem:[#allocation7 + $0x38] sm:$0xf]
    %v939 = vld [vmem:[#allocation7 + $0x3c] sm:$0xf]
    %v940 = vld [vmem:[#allocation7 + $0x40] sm:$0xf]
    %v941 = vld [vmem:[#allocation7 + $0x44] sm:$0xf]
    %v942 = vld [vmem:[#allocation7 + $0x48] sm:$0xf]
    %v943 = vld [vmem:[#allocation7 + $0x4c] sm:$0xf]
    %v944 = vld [vmem:[#allocation7 + $0x50] sm:$0xf]
    %v945 = vld [vmem:[#allocation7 + $0x54] sm:$0xf]
    %v946 = vld [vmem:[#allocation7 + $0x58] sm:$0xf]
    %v947 = vld [vmem:[#allocation7 + $0x5c] sm:$0xf]
    %v948 = vld [vmem:[#allocation7 + $0x60] sm:$0xf]
    %v949 = vld [vmem:[#allocation7 + $0x64] sm:$0xf]
    %v950 = vld [vmem:[#allocation7 + $0x68] sm:$0xf]
    %v951 = vld [vmem:[#allocation7 + $0x6c] sm:$0xf]
    %v952 = vld [vmem:[#allocation7 + $0x70] sm:$0xf]
    %v953 = vld [vmem:[#allocation7 + $0x74] sm:$0xf]
    %v954 = vld [vmem:[#allocation7 + $0x78] sm:$0xf]
    %v955 = vld [vmem:[#allocation7 + $0x7c] sm:$0xf]
    %v956 = vld [vmem:[#allocation7 + $0x80] sm:$0xf]
    %v957 = vld [vmem:[#allocation7 + $0x84] sm:$0xf]
    %v958 = vld [vmem:[#allocation7 + $0x88] sm:$0xf]
    %v959 = vld [vmem:[#allocation7 + $0x8c] sm:$0xf]
    %v960 = vld [vmem:[#allocation7 + $0x90] sm:$0xf]
    %v961 = vld [vmem:[#allocation7 + $0x94] sm:$0xf]
    %v962 = vld [vmem:[#allocation7 + $0x98] sm:$0xf]
    %v963 = vld [vmem:[#allocation7 + $0x9c] sm:$0xf]
    %v964 = vld [vmem:[#allocation7 + $0xa0] sm:$0xf]
    %v965 = vld [vmem:[#allocation7 + $0xa4] sm:$0xf]
    %v966 = vld [vmem:[#allocation7 + $0xa8] sm:$0xf]
    %v967 = vld [vmem:[#allocation7 + $0xac] sm:$0xf]
    %v968 = vld [vmem:[#allocation7 + $0xb0] sm:$0xf]
    %v969 = vld [vmem:[#allocation7 + $0xb4] sm:$0xf]
    %v970 = vld [vmem:[#allocation7 + $0xb8] sm:$0xf]
    %v971 = vld [vmem:[#allocation7 + $0xbc] sm:$0xf]
    %v972 = vld [vmem:[#allocation7 + $0xc0] sm:$0xf]
    %v973 = vld [vmem:[#allocation7 + $0xc4] sm:$0xf]
    %v974 = vld [vmem:[#allocation7 + $0xc8] sm:$0xf]
    %v975 = vld [vmem:[#allocation7 + $0xcc] sm:$0xf]
    %v976 = vld [vmem:[#allocation7 + $0xd0] sm:$0xf]
    %v977 = vld [vmem:[#allocation7 + $0xd4] sm:$0xf]
    %v978 = vld [vmem:[#allocation7 + $0xd8] sm:$0xf]
    %v979 = vld [vmem:[#allocation7 + $0xdc] sm:$0xf]
    %v980 = vld [vmem:[#allocation7 + $0xe0] sm:$0xf]
    %v981 = vld [vmem:[#allocation7 + $0xe4] sm:$0xf]
    %v982 = vld [vmem:[#allocation7 + $0xe8] sm:$0xf]
    %v983 = vld [vmem:[#allocation7 + $0xec] sm:$0xf]
    %v984 = vld [vmem:[#allocation7 + $0xf0] sm:$0xf]
    %v985 = vld [vmem:[#allocation7 + $0xf4] sm:$0xf]
    %v986 = vld [vmem:[#allocation7 + $0xf8] sm:$0xf]
    %v987 = vld [vmem:[#allocation7 + $0xfc] sm:$0xf]
    %v988 = vpack.c.bf16 %v920, %v920
    %v989 = vpack.c.bf16 %v921, %v921
    %v990 = vpack.c.bf16 %v922, %v922
    %v991 = vpack.c.bf16 %v923, %v923
    %v1056 = vunpack.c.l.b16 %v924
    %v1057 = vunpack.c.l.b16 %v925
    %v1058 = vunpack.c.l.b16 %v926
    %v1059 = vunpack.c.l.b16 %v927
    %v1060 = vunpack.c.l.b16 %v928
    %v1061 = vunpack.c.l.b16 %v929
    %v1062 = vunpack.c.l.b16 %v930
    %v1063 = vunpack.c.l.b16 %v931
    %v1064 = vunpack.c.l.b16 %v932
    %v1065 = vunpack.c.l.b16 %v933
    %v1066 = vunpack.c.l.b16 %v934
    %v1067 = vunpack.c.l.b16 %v935
    %v1068 = vunpack.c.l.b16 %v936
    %v1069 = vunpack.c.l.b16 %v937
    %v1070 = vunpack.c.l.b16 %v938
    %v1071 = vunpack.c.l.b16 %v939
    %v1072 = vunpack.c.l.b16 %v940
    %v1073 = vunpack.c.l.b16 %v941
    %v1074 = vunpack.c.l.b16 %v942
    %v1075 = vunpack.c.l.b16 %v943
    %v1076 = vunpack.c.l.b16 %v944
    %v1077 = vunpack.c.l.b16 %v945
    %v1078 = vunpack.c.l.b16 %v946
    %v1079 = vunpack.c.l.b16 %v947
    %v1080 = vunpack.c.l.b16 %v948
    %v1081 = vunpack.c.l.b16 %v949
    %v1082 = vunpack.c.l.b16 %v950
    %v1083 = vunpack.c.l.b16 %v951
    %v1084 = vunpack.c.l.b16 %v952
    %v1085 = vunpack.c.l.b16 %v953
    %v1086 = vunpack.c.l.b16 %v954
    %v1087 = vunpack.c.l.b16 %v955
    %v1088 = vunpack.c.l.b16 %v956
    %v1089 = vunpack.c.l.b16 %v957
    %v1090 = vunpack.c.l.b16 %v958
    %v1091 = vunpack.c.l.b16 %v959
    %v1092 = vunpack.c.l.b16 %v960
    %v1093 = vunpack.c.l.b16 %v961
    %v1094 = vunpack.c.l.b16 %v962
    %v1095 = vunpack.c.l.b16 %v963
    %v1096 = vunpack.c.l.b16 %v964
    %v1097 = vunpack.c.l.b16 %v965
    %v1098 = vunpack.c.l.b16 %v966
    %v1099 = vunpack.c.l.b16 %v967
    %v1100 = vunpack.c.l.b16 %v968
    %v1101 = vunpack.c.l.b16 %v969
    %v1102 = vunpack.c.l.b16 %v970
    %v1103 = vunpack.c.l.b16 %v971
    %v1104 = vunpack.c.l.b16 %v972
    %v1105 = vunpack.c.l.b16 %v973
    %v1106 = vunpack.c.l.b16 %v974
    %v1107 = vunpack.c.l.b16 %v975
    %v1108 = vunpack.c.l.b16 %v976
    %v1109 = vunpack.c.l.b16 %v977
    %v1110 = vunpack.c.l.b16 %v978
    %v1111 = vunpack.c.l.b16 %v979
    %v1112 = vunpack.c.l.b16 %v980
    %v1113 = vunpack.c.l.b16 %v981
    %v1114 = vunpack.c.l.b16 %v982
    %v1115 = vunpack.c.l.b16 %v983
    %v1116 = vunpack.c.l.b16 %v984
    %v1117 = vunpack.c.l.b16 %v985
    %v1118 = vunpack.c.l.b16 %v986
    %v1119 = vunpack.c.l.b16 %v987
    %v1120 = vpack.c.b16 %v1057, %v1056
    %v1121 = vpack.c.b16 %v1059, %v1058
    %v1122 = vpack.c.b16 %v1061, %v1060
    %v1123 = vpack.c.b16 %v1063, %v1062
    %v1124 = vpack.c.b16 %v1065, %v1064
    %v1125 = vpack.c.b16 %v1067, %v1066
    %v1126 = vpack.c.b16 %v1069, %v1068
    %v1127 = vpack.c.b16 %v1071, %v1070
    %v1128 = vpack.c.b16 %v1073, %v1072
    %v1129 = vpack.c.b16 %v1075, %v1074
    %v1130 = vpack.c.b16 %v1077, %v1076
    %v1131 = vpack.c.b16 %v1079, %v1078
    %v1132 = vpack.c.b16 %v1081, %v1080
    %v1133 = vpack.c.b16 %v1083, %v1082
    %v1134 = vpack.c.b16 %v1085, %v1084
    %v1135 = vpack.c.b16 %v1087, %v1086
    %v1136 = vpack.c.b16 %v1089, %v1088
    %v1137 = vpack.c.b16 %v1091, %v1090
    %v1138 = vpack.c.b16 %v1093, %v1092
    %v1139 = vpack.c.b16 %v1095, %v1094
    %v1140 = vpack.c.b16 %v1097, %v1096
    %v1141 = vpack.c.b16 %v1099, %v1098
    %v1142 = vpack.c.b16 %v1101, %v1100
    %v1143 = vpack.c.b16 %v1103, %v1102
    %v1144 = vpack.c.b16 %v1105, %v1104
    %v1145 = vpack.c.b16 %v1107, %v1106
    %v1146 = vpack.c.b16 %v1109, %v1108
    %v1147 = vpack.c.b16 %v1111, %v1110
    %v1148 = vpack.c.b16 %v1113, %v1112
    %v1149 = vpack.c.b16 %v1115, %v1114
    %v1150 = vpack.c.b16 %v1117, %v1116
    %v1151 = vpack.c.b16 %v1119, %v1118
    %1184 = vmatpush.bf16.msra.mxu0 %v1127
    %1185 = vmatpush.bf16.msra.mxu0 %v1126
    %1186 = vmatpush.bf16.msra.mxu0 %v1125
    %1187 = vmatpush.bf16.msra.mxu0 %v1124
    %1188 = vmatpush.bf16.msra.mxu0 %v1123
    %1189 = vmatpush.bf16.msra.mxu0 %v1122
    %1190 = vmatpush.bf16.msra.mxu0 %v1121
    %1191 = vmatpush.bf16.msra.mxu0 %v1120
    %1192 = vmatmul.bf16.gmra.mxu0 %v988
    %v1193 = vpop.f32.mrf.mxu0
    %v1194 = vadd.f32 0.0, %v1193
    %v1195 = vpop.f32.mrf.mxu0
    %1196 = vdwg.mxu0
    %1197 = vmatpush.bf16.msra.mxu0 %v1135
    %1198 = vmatpush.bf16.msra.mxu0 %v1134
    %1199 = vmatpush.bf16.msra.mxu0 %v1133
    %1200 = vmatpush.bf16.msra.mxu0 %v1132
    %1201 = vmatpush.bf16.msra.mxu0 %v1131
    %1202 = vmatpush.bf16.msra.mxu0 %v1130
    %1203 = vmatpush.bf16.msra.mxu0 %v1129
    %1204 = vmatpush.bf16.msra.mxu0 %v1128
    %1205 = vmatmul.bf16.gmra.mxu0 %v989
    %v1206 = vpop.f32.mrf.mxu0
    %v1207 = vadd.f32 %v1194, %v1206
    %v1208 = vpop.f32.mrf.mxu0
    %1209 = vdwg.mxu0
    %1210 = vmatpush.bf16.msra.mxu0 %v1143
    %1211 = vmatpush.bf16.msra.mxu0 %v1142
    %1212 = vmatpush.bf16.msra.mxu0 %v1141
    %1213 = vmatpush.bf16.msra.mxu0 %v1140
    %1214 = vmatpush.bf16.msra.mxu0 %v1139
    %1215 = vmatpush.bf16.msra.mxu0 %v1138
    %1216 = vmatpush.bf16.msra.mxu0 %v1137
    %1217 = vmatpush.bf16.msra.mxu0 %v1136
    %1218 = vmatmul.bf16.gmra.mxu0 %v990
    %v1219 = vpop.f32.mrf.mxu0
    %v1220 = vadd.f32 %v1207, %v1219
    %v1221 = vpop.f32.mrf.mxu0
    %1222 = vdwg.mxu0
    %1223 = vmatpush.bf16.msra.mxu0 %v1151
    %1224 = vmatpush.bf16.msra.mxu0 %v1150
    %1225 = vmatpush.bf16.msra.mxu0 %v1149
    %1226 = vmatpush.bf16.msra.mxu0 %v1148
    %1227 = vmatpush.bf16.msra.mxu0 %v1147
    %1228 = vmatpush.bf16.msra.mxu0 %v1146
    %1229 = vmatpush.bf16.msra.mxu0 %v1145
    %1230 = vmatpush.bf16.msra.mxu0 %v1144
    %1231 = vmatmul.bf16.gmra.mxu0 %v991
    %v1232 = vpop.f32.mrf.mxu0
    %v1233 = vadd.f32 %v1220, %v1232
    %v1234 = vpop.f32.mrf.mxu0
    %1235 = vdwg.mxu0
    %1236 = vst [vmem:[#allocation10] sm:$0xff] %v1233
    // Predicated region
    $region42: #{tpu_custom_call.1} parent=1 // pred_check
      _
    $region43: #{tpu_custom_call.1} parent=1 // pred_check_branch
      %1238 = sbr.rel (0) target = $region45
    $region44: #{tpu_custom_call.1} parent=1 // pred_region
      %1240 = vsyncadd [#allocation6], 0
      %s1242 = sshll.u32 [#allocation10], 4
      %s1243 = int_to_ptr.vmem [resolvable:$true] %s1242
      %s1244 = sshll.u32 %s7, 4
      %s1245 = int_to_ptr.hbm [resolvable:$true] %s1244
      %1247 = dma.vmem_to_hbm [thread:$0]  %s1243, 128, %s1245, [#allocation6]
    $region45: #{tpu_custom_call.1} parent=1 // pred_fallthru
      _
    // Predicated region
    $region46: #{tpu_custom_call.1} parent=1 // pred_check
      _
    $region47: #{tpu_custom_call.1} parent=1 // pred_check_branch
      %1249 = sbr.rel (0) target = $region49
    $region48: #{tpu_custom_call.1} parent=1 // pred_region
      %1251 = vsyncadd [#allocation12], 0
      %s1252 = sshll.u32 [#allocation11], 4
      %s1253 = int_to_ptr.vmem [resolvable:$true] %s1252
      %s1254 = sshll.u32 %s8, 4
      %s1255 = int_to_ptr.hbm [resolvable:$true] %s1254
      %1260 = dma.vmem_to_hbm [thread:$0]  %s1253, 512, %s1255, [#allocation12], 256, 256, 16
    $region49: #{tpu_custom_call.1} parent=1 // pred_fallthru
      _
    // Predicated region
    $region50: #{tpu_custom_call.1} parent=1 // pred_check
      _
    $region51: #{tpu_custom_call.1} parent=1 // pred_check_branch
      %1262 = sbr.rel (0) target = $region53
    $region52: #{tpu_custom_call.1} parent=1 // pred_region
      %1264 = dma.done [#allocation6], 128
    $region53: #{tpu_custom_call.1} parent=1 // pred_fallthru
      _
    // Predicated region
    $region54: #{tpu_custom_call.1} parent=1 // pred_check
      _
    $region55: #{tpu_custom_call.1} parent=1 // pred_check_branch
      %1266 = sbr.rel (0) target = $region57
    $region56: #{tpu_custom_call.1} parent=1 // pred_region
      %1268 = dma.done [#allocation12], 512
    $region57: #{tpu_custom_call.1} parent=1 // pred_fallthru
      _
    %1269 = vsyncpa [#allocation5], 1
    %1270 = vsyncpa [#allocation8], 1
    %1271 = vsyncpa [#allocation6], 1
    %1272 = vsyncpa [#allocation12], 1

</llo_original>
